<compile_context>
chip_gen: v7x
topology: tpu7x:2x2x1
jax: 0.10.0
libtpu: 0.0.40
codegen_flags: <defaults>
</compile_context>

<pallas_src>
import functools
import math

import numpy as np

import jax
import jax.numpy as jnp
from jax.experimental import pallas as pl
from jax.experimental.pallas import tpu as pltpu


# ----------------------------- static index maps ------------------------------

# rows of the stacked (n_mat, L, L) weight/selector tensor
(_M_MEAN, _M_EHEAD, _M_WQ, _M_WK, _M_WV,
 _M_WFB_F, _M_WFB_R, _M_WO1, _M_WOUT) = range(9)
# rows of the stacked (n_vec, L) bias / LN-parameter tensor
(_V_ENC_W, _V_ENC_B, _V_LN1_W, _V_LN1_B, _V_BQ, _V_BK, _V_BV,
 _V_BFB, _V_LN2_W, _V_LN2_B, _V_BO1, _V_BOUT) = range(12)


# ------------------------------ small helpers ---------------------------------

def _erf(x):
    # Abramowitz & Stegun 7.1.26 rational approximation, |err| <= 1.5e-7:
    # keeps nn.GELU()'s exact-erf semantics within f32 tolerance while lowering
    # to exp/mul/where only (no erf primitive required in Mosaic).
    a1, a2, a3, a4, a5 = (0.254829592, -0.284496736, 1.421413741,
                          -1.453152027, 1.061405429)
    t = 1.0 / (1.0 + 0.3275911 * jnp.abs(x))
    poly = t * (a1 + t * (a2 + t * (a3 + t * (a4 + t * a5))))
    y = 1.0 - poly * jnp.exp(-(x * x))
    return jnp.where(x < 0.0, -y, y)


def _gelu_exact(x):
    return 0.5 * x * (1.0 + _erf(x * (1.0 / math.sqrt(2.0))))


def _const_spec(shape, index_map):
    """Weight-style input: constant block index + single buffering (halves weight
    VMEM vs. the default double-buffering).  Falls back to a plain BlockSpec if the
    installed JAX does not support pipeline_mode."""
    try:
        return pl.BlockSpec(shape, index_map, pipeline_mode=pl.Buffered(1))
    except Exception:  # pragma: no cover - older JAX without pipeline_mode
        return pl.BlockSpec(shape, index_map)


@functools.lru_cache(maxsize=None)
def _selector_mats(pack, dim, num_heads):
    """Packed-layout selector matrices.

    mean_sel (L, L): y @ mean_sel  -> per-timestep-segment mean, broadcast to the
                     segment's lanes (used for both LN mean and LN variance).
    head_sel (L, L): u @ head_sel  -> per-(timestep, head) sum, broadcast back to
                     the head's channels (attention score reduction).
    """
    hd = dim // num_heads
    eye_p = np.eye(pack, dtype=np.float32)
    mean_sel = np.kron(eye_p, np.full((dim, dim), 1.0 / dim, np.float32))
    head_blk = np.kron(np.eye(num_heads, dtype=np.float32),
                       np.ones((hd, hd), np.float32))
    head_sel = np.kron(eye_p, head_blk)
    return jnp.asarray(mean_sel), jnp.asarray(head_sel)


def _layer_shift_descriptors(t, scale, lp):
    """Per-(branch, step) dislocation source-time indices, replicating the PyTorch
    pad + slice semantics exactly.  Returns (steps_fwd, steps_rev, shift_mats):
    a step descriptor is None for the identity shift, otherwise an index into
    shift_mats (list of (T, T) 0/1 gather matrices, zero rows = zero padding)."""
    length = t + (scale - 1) * lp
    a = length - t - scale
    start = a if a >= 0 else max(length + a, 0)
    if length - start != t:
        raise ValueError("dislocation reverse slice length != T "
                         "(same constraint as the PyTorch module)")

    mats, keymap = [], {}

    def descr(src):
        if tuple(src) == tuple(range(t)):
            return None
        key = tuple(src)
        if key not in keymap:
            m = np.zeros((t, t), np.float32)
            for row, s in enumerate(src):
                if 0 <= s < t:
                    m[row, s] = 1.0
            keymap[key] = len(mats)
            mats.append(m)
        return keymap[key]

    steps_fwd = tuple(descr([tt - i * lp for tt in range(t)])
                      for i in range(scale))
    steps_rev = tuple(descr([start + tt - (scale - 1 - i) * lp for tt in range(t)])
                      for i in range(scale))
    return steps_fwd, steps_rev, mats


def _choose_bm(n_pack, align, lane):
    """Packed-row block: divides n_pack, multiple of `align` (whole sequences when
    dislocation shifts are live), multiple of 8 sublanes (or the whole array),
    bounded so double-buffered in+out blocks stay ~24 MiB (v7x 64 MiB VMEM
    headroom), and leaving >= 2 'parallel' grid steps when possible (dual TC)."""
    target = max(8, min(512, (24 << 20) // max(16 * lane, 1)))

    def ok(m):
        return (n_pack % m == 0 and m % align == 0
                and (m % 8 == 0 or m == n_pack))

    cands = [m for m in range(1, min(n_pack, target) + 1) if ok(m)]
    if not cands:
        return n_pack
    multi = [m for m in cands if n_pack // m >= 2]
    return max(multi) if multi else max(cands)


# ----------------------------- fused layer kernel -----------------------------

def _fused_layer_kernel(*refs, steps_fwd, steps_rev, reuse_rev, inv_sqrt_hd,
                        eps, fold_out, has_shift):
    """enc-LN -> LN1 -> QKV -> dislocation -> bidirectional attention -> Wfb ->
    residual -> LN2 -> Wo1 -> GELU [-> encoder out_layer], all resident in VMEM."""
    if has_shift:
        x_ref, vecs_ref, mats_ref, sh_ref, o_ref = refs
    else:
        x_ref, vecs_ref, mats_ref, o_ref = refs
        sh_ref = None

    f32 = jnp.float32
    vecs = vecs_ref[...].astype(f32)                 # (n_vec, L)
    mean_sel = mats_ref[_M_MEAN].astype(f32)         # (L, L)
    head_sel = mats_ref[_M_EHEAD].astype(f32)        # (L, L)

    def vrow(i):
        return vecs[i:i + 1, :]                      # (1, L)

    def mat(i):
        return mats_ref[i].astype(f32)               # (L, L)

    def mm(a, b):
        return jnp.dot(a, b, preferred_element_type=f32)

    def seg_ln(y, wi, bi):
        # Segmented (per-timestep) LayerNorm via selector matmul: stays correct in
        # the packed layout and keeps the reduction on the otherwise-idle MXU.
        mu = mm(y, mean_sel)
        yc = y - mu
        var = mm(yc * yc, mean_sel)
        return yc * jax.lax.rsqrt(var + eps) * vrow(wi) + vrow(bi)

    x = x_ref[...].astype(f32)                       # (bm, L)
    x = seg_ln(x, _V_ENC_W, _V_ENC_B)                # shared encoder LayerNorm
    xln = seg_ln(x, _V_LN1_W, _V_LN1_B)              # module LayerNorm1

    q = mm(xln, mat(_M_WQ)) + vrow(_V_BQ)
    k = mm(xln, mat(_M_WK)) + vrow(_V_BK)
    v = mm(xln, mat(_M_WV)) + vrow(_V_BV)

    def shifted(y, sid):
        # In-kernel dislocation: identity for shift 0 (the usual case); otherwise a
        # block-diagonal row-shift matmul that also zero-masks out-of-range times.
        if sid is None:
            return y
        return mm(sh_ref[sid].astype(f32), y)

    def branch(steps):
        q1 = shifted(q, steps[1])                    # only dislocation step 1 is used
        scores, vals = [], []
        for sid in steps:
            kj = shifted(k, sid)
            scores.append(mm(kj * q1, head_sel) * inv_sqrt_hd)
            vals.append(shifted(v, sid))
        m = scores[0]
        for s in scores[1:]:
            m = jnp.maximum(m, s)
        ps = [jnp.exp(s - m) for s in scores]
        z = ps[0]
        for p in ps[1:]:
            z = z + p
        inv_z = pl.reciprocal(z, approx=True)        # EUP slot; nearly free
        inv_z = inv_z * (2.0 - z * inv_z)            # one Newton step -> f32 accuracy
        acc = (ps[0] * inv_z) * vals[0]
        for p, vv in zip(ps[1:], vals[1:]):
            acc = acc + (p * inv_z) * vv
        return acc

    out_f = branch(steps_fwd)
    out_r = out_f if reuse_rev else branch(steps_rev)

    # fwd/bkw combine without a lane concat: cat(out_f, out_r) @ Wfb
    #   == out_f @ Wfb[:D] + out_r @ Wfb[D:]
    y = mm(out_f, mat(_M_WFB_F)) + mm(out_r, mat(_M_WFB_R)) + vrow(_V_BFB)
    y = y + xln                                      # residual with LN1 output
    y = seg_ln(y, _V_LN2_W, _V_LN2_B)
    y = mm(y, mat(_M_WO1)) + vrow(_V_BO1)
    y = _gelu_exact(y)
    if fold_out:                                     # encoder out_layer (last layer)
        y = mm(y, mat(_M_WOUT)) + vrow(_V_BOUT)
    o_ref[...] = y.astype(o_ref.dtype)               # full 128-lane unmasked store


def _fused_layer(xp, vecs, mats, shifts, *, bm, lane, steps_fwd, steps_rev,
                 dim, num_heads, fold_out, eps=1e-6):
    n_pack = xp.shape[0]
    grid = n_pack // bm
    head_size = dim // num_heads
    has_shift = shifts is not None

    kernel = functools.partial(
        _fused_layer_kernel,
        steps_fwd=tuple(steps_fwd), steps_rev=tuple(steps_rev),
        reuse_rev=tuple(steps_fwd) == tuple(steps_rev),
        inv_sqrt_hd=1.0 / math.sqrt(head_size), eps=eps,
        fold_out=fold_out, has_shift=has_shift)

    in_specs = [pl.BlockSpec((bm, lane), lambda i: (i, 0)),
                _const_spec(vecs.shape, lambda i: (0, 0)),
                _const_spec(mats.shape, lambda i: (0, 0, 0))]
    args = [xp, vecs, mats]
    if has_shift:
        in_specs.append(_const_spec(shifts.shape, lambda i: (0, 0, 0)))
        args.append(shifts)

    est = 4 * (4 * bm * lane + vecs.size + mats.size
               + (shifts.size if has_shift else 0))
    vmem_limit = int(min(max(4 * est, 32 << 20), 100 << 20))

    return pl.pallas_call(
        kernel,
        out_shape=jax.ShapeDtypeStruct((n_pack, lane), xp.dtype),
        grid=(grid,),
        in_specs=in_specs,
        out_specs=pl.BlockSpec((bm, lane), lambda i: (i, 0)),
        compiler_params=pltpu.CompilerParams(
            dimension_semantics=("parallel",),
            vmem_limit_bytes=vmem_limit),
    )(*args)


# -------------------------- weight packing (per layer) ------------------------

def _pack_layer_params(layer, enc_w, enc_b, out_w, out_b, *, pack, dim, num_heads):
    """Stack all per-layer parameters into one (n_vec, L) and one (n_mat, L, L)
    tensor in the packed-lane layout (weights become kron(I_P, W))."""
    eye = jnp.eye(pack, dtype=jnp.float32)

    def pm(w):
        return jnp.kron(eye, w.astype(jnp.float32))

    def pv(b):
        return jnp.tile(b.astype(jnp.float32), pack)

    mean_sel, head_sel = _selector_mats(pack, dim, num_heads)
    mats = [mean_sel, head_sel, pm(layer["Wq"]), pm(layer["Wk"]), pm(layer["Wv"]),
            pm(layer["Wfb"][:dim]), pm(layer["Wfb"][dim:]), pm(layer["Wo1"])]
    vecs = [pv(enc_w), pv(enc_b), pv(layer["ln1_w"]), pv(layer["ln1_b"]),
            pv(layer["bq"]), pv(layer["bk"]), pv(layer["bv"]), pv(layer["bfb"]),
            pv(layer["ln2_w"]), pv(layer["ln2_b"]), pv(layer["bo1"])]
    if out_w is not None:
        mats.append(pm(out_w))
        vecs.append(pv(out_b))
    return jnp.stack(vecs), jnp.stack(mats)


# ------------------------------- encoder forward ------------------------------

def encoder_forward(x, params, *, num_heads, module_scale):
    """TemporalAttentionEncoder forward: exactly one pallas_call per layer (the
    encoder out_layer is folded into the last layer's kernel)."""
    b, t, d = x.shape
    rows = b * t
    num_layers = len(params["layers"])
    if num_layers < 1:
        raise ValueError("need at least one temporal attention layer")

    # Lane packing: P consecutive timesteps per 128-lane row.
    p_factor = 128 // d if (d < 128 and 128 % d == 0 and rows % (128 // d) == 0) else 1
    lane = p_factor * d
    n_pack = rows // p_factor

    shift_plans = [_layer_shift_descriptors(t, module_scale, i)
                   for i in range(num_layers)]
    any_shift = any(plan[2] for plan in shift_plans)
    if any_shift and p_factor != 1:
        # TODO(synk): nonzero dislocation shifts in the lane-packed layout would need
        # cross-row lane permutations; the original module only admits
        # linear_padding == 0 (T <= scale) or T == 1, so this path is unreachable.
        raise NotImplementedError("packed layout with nonzero dislocation shift")
    align = (t // p_factor) if any_shift else 1
    bm = _choose_bm(n_pack, align, lane)

    out = x.reshape(n_pack, lane)
    for li in range(num_layers):
        is_last = li == num_layers - 1
        vecs, mats = _pack_layer_params(
            params["layers"][li], params["enc_ln_w"], params["enc_ln_b"],
            params["out_W"] if is_last else None,
            params["out_b"] if is_last else None,
            pack=p_factor, dim=d, num_heads=num_heads)
        steps_fwd, steps_rev, sh_small = shift_plans[li]
        shifts = None
        if sh_small:
            eye_nb = np.eye(bm // t, dtype=np.float32)
            shifts = jnp.asarray(np.stack([np.kron(eye_nb, m) for m in sh_small]))
        out = _fused_layer(out, vecs, mats, shifts,
                           bm=bm, lane=lane,
                           steps_fwd=steps_fwd, steps_rev=steps_rev,
                           dim=d, num_heads=num_heads, fold_out=is_last)
    return out.reshape(b, t, d)


# ----------------------------- pure-JAX reference -----------------------------

def dislocate(x, scale, lp, reverse):
    """Faithful port of TemporalAttentionModule.dislocation_and_padding."""
    b, t, d = x.shape
    parts = []
    for i in range(scale):
        if reverse:
            left, right = (scale - 1 - i) * lp, i * lp
        else:
            left, right = i * lp, (scale - 1 - i) * lp
        parts.append(jnp.pad(x, ((0, 0), (left, right), (0, 0)))[:, :, None, :])
    inter = jnp.concatenate(parts, axis=2)          # (B, L, scale, D)
    length = t + (scale - 1) * lp
    if reverse:
        start = length - t - scale                  # python slicing semantics
        if start < 0:
            start = max(length + start, 0)
        return inter[:, start:, :, :]
    return inter[:, :t, :, :]


def _ref_layernorm(x, w, b, eps=1e-6):
    mu = jnp.mean(x, axis=-1, keepdims=True)
    var = jnp.mean((x - mu) ** 2, axis=-1, keepdims=True)
    return (x - mu) / jnp.sqrt(var + eps) * w + b


def _ref_module(x, p, *, num_heads, scale, linear_padding):
    b, t, d = x.shape
    hd = d // num_heads
    xln = _ref_layernorm(x, p["ln1_w"], p["ln1_b"])
    q = xln @ p["Wq"] + p["bq"]
    k = xln @ p["Wk"] + p["bk"]
    v = xln @ p["Wv"] + p["bv"]

    def t4s(y):
        bb, tt, ss, _ = y.shape
        return y.reshape(bb, tt, ss, num_heads, hd).transpose(0, 1, 3, 2, 4)

    def branch(reverse):
        qd = t4s(dislocate(q, scale, linear_padding, reverse))
        kd = t4s(dislocate(k, scale, linear_padding, reverse))
        vd = t4s(dislocate(v, scale, linear_padding, reverse))
        attn = jnp.einsum("bthid,bthjd->bthij", qd, kd) / math.sqrt(hd)
        attn = jax.nn.softmax(attn, axis=-1)
        sv = jnp.einsum("bthij,bthjd->bthid", attn, vd)
        sv = sv.transpose(0, 1, 3, 2, 4).reshape(sv.shape[0], sv.shape[1], scale, d)
        return sv[:, :, 1, :]

    out = jnp.concatenate([branch(False), branch(True)], axis=2)
    out = out @ p["Wfb"] + p["bfb"]
    out = out + xln
    out = _ref_layernorm(out, p["ln2_w"], p["ln2_b"])
    out = out @ p["Wo1"] + p["bo1"]
    return jax.nn.gelu(out, approximate=False)


def _ref_encoder(x, params, *, num_heads, module_scale):
    out = x
    for i, lp in enumerate(params["layers"]):
        out = _ref_layernorm(out, params["enc_ln_w"], params["enc_ln_b"])
        out = _ref_module(out, lp, num_heads=num_heads,
                          scale=module_scale, linear_padding=i)
    return out @ params["out_W"] + params["out_b"]


# ----------------------------- parameters -------------------------------------

def init_params(key, dim, num_layers):
    keys = jax.random.split(key, 4 + num_layers)

    def w(k, shape, s):
        return jax.random.normal(k, shape, jnp.float32) * s

    params = {
        "enc_ln_w": 1.0 + w(keys[0], (dim,), 0.05),
        "enc_ln_b": w(keys[1], (dim,), 0.05),
        "out_W": w(keys[2], (dim, dim), 1.0 / math.sqrt(dim)),
        "out_b": w(keys[3], (dim,), 0.01),
        "layers": [],
    }
    for i in range(num_layers):
        lk = jax.random.split(keys[4 + i], 14)
        params["layers"].append({
            "ln1_w": 1.0 + w(lk[0], (dim,), 0.05),
            "ln1_b": w(lk[1], (dim,), 0.05),
            "ln2_w": 1.0 + w(lk[2], (dim,), 0.05),
            "ln2_b": w(lk[3], (dim,), 0.05),
            "Wq": w(lk[4], (dim, dim), 1.0 / math.sqrt(dim)),
            "bq": w(lk[5], (dim,), 0.01),
            "Wk": w(lk[6], (dim, dim), 1.0 / math.sqrt(dim)),
            "bk": w(lk[7], (dim,), 0.01),
            "Wv": w(lk[8], (dim, dim), 1.0 / math.sqrt(dim)),
            "bv": w(lk[9], (dim,), 0.01),
            "Wfb": w(lk[10], (2 * dim, dim), 1.0 / math.sqrt(2 * dim)),
            "bfb": w(lk[11], (dim,), 0.01),
            "Wo1": w(lk[12], (dim, dim), 1.0 / math.sqrt(dim)),
            "bo1": w(lk[13], (dim,), 0.01),
        })
    return params


# ----------------------------- main --------------------------------------------

if __name__ == "__main__":
    # Encoder(dim=32, num_heads=4, scale=3, num_layers=1)  ->  module scale = 4, lp = 0.
    # T must satisfy the module's implicit shape constraint (T <= module scale).
    # B=16 gives 64 rows -> 16 packed 128-lane rows -> bm=8 and a 2-step parallel grid.
    B, T, D, H = 16, 4, 32, 4
    ENC_SCALE, NUM_LAYERS = 3, 1
    MODULE_SCALE = ENC_SCALE + 1

    key = jax.random.PRNGKey(0)
    kx, kp = jax.random.split(key)
    x = jax.random.normal(kx, (B, T, D), dtype=jnp.float32)
    params = init_params(kp, D, NUM_LAYERS)

    fwd = jax.jit(functools.partial(encoder_forward, num_heads=H,
                                    module_scale=MODULE_SCALE))
    out = jax.block_until_ready(fwd(x, params))

    ref = _ref_encoder(x, params, num_heads=H, module_scale=MODULE_SCALE)
    assert out.shape == (B, T, D)
    if not jnp.allclose(out, ref, atol=2e-4, rtol=2e-4):
        err = float(jnp.max(jnp.abs(out - ref)))
        raise AssertionError(
            "Pallas output mismatches pure-JAX reference (max abs err %.3e)" % err)
    print("KERNEL_OK")
</pallas_src>

<mosaic_0001>
module attributes {stable_mosaic.version = 11 : i64} {
  func.func @_fused_layer_kernel(%arg0: i32, %arg1: memref<8x128xf32, #tpu.memory_space<vmem>>, %arg2: memref<12x128xf32, #tpu.memory_space<vmem>>, %arg3: memref<9x128x128xf32, #tpu.memory_space<vmem>>, %arg4: memref<8x128xf32, #tpu.memory_space<vmem>>) attributes {dimension_semantics = [#tpu.dimension_semantics<parallel>], iteration_bounds = array<i64: 2>, scalar_prefetch = 0 : i64, scratch_operands = 0 : i64, tpu.core_type = #tpu.core_type<tc>, window_params = [{transform_indices = @transform_0, window_bounds = array<i64: 8, 128>}, {pipeline_mode = #tpu.pipeline_mode<synchronous>, transform_indices = @transform_1, window_bounds = array<i64: 12, 128>}, {pipeline_mode = #tpu.pipeline_mode<synchronous>, transform_indices = @transform_2, window_bounds = array<i64: 9, 128, 128>}, {transform_indices = @transform_3, window_bounds = array<i64: 8, 128>}]} {
    %c0 = arith.constant 0 : index
    %c0_0 = arith.constant 0 : index
    %0 = vector.load %arg2[%c0, %c0_0] : memref<12x128xf32, #tpu.memory_space<vmem>>, vector<12x128xf32>
    %c0_1 = arith.constant 0 : index
    %c0_2 = arith.constant 0 : index
    %c0_3 = arith.constant 0 : index
    %1 = vector.load %arg3[%c0_1, %c0_2, %c0_3] : memref<9x128x128xf32, #tpu.memory_space<vmem>>, vector<1x128x128xf32>
    %2 = vector.shape_cast %1 : vector<1x128x128xf32> to vector<128x128xf32>
    %c1 = arith.constant 1 : index
    %c0_4 = arith.constant 0 : index
    %c0_5 = arith.constant 0 : index
    %3 = vector.load %arg3[%c1, %c0_4, %c0_5] : memref<9x128x128xf32, #tpu.memory_space<vmem>>, vector<1x128x128xf32>
    %4 = vector.shape_cast %3 : vector<1x128x128xf32> to vector<128x128xf32>
    %c0_6 = arith.constant 0 : index
    %c0_7 = arith.constant 0 : index
    %5 = vector.load %arg1[%c0_6, %c0_7] : memref<8x128xf32, #tpu.memory_space<vmem>>, vector<8x128xf32>
    %cst = arith.constant dense<0.000000e+00> : vector<8x128xf32>
    %6 = tpu.matmul %5, %2, %cst {dimension_numbers = #tpu.dot_dimension_numbers<[1], [0], [0], [1], [0, 0, 1, 1], [], []>} : vector<8x128xf32>, vector<128x128xf32>, vector<8x128xf32> -> vector<8x128xf32>
    %7 = arith.subf %5, %6 : vector<8x128xf32>
    %8 = arith.mulf %7, %7 : vector<8x128xf32>
    %cst_8 = arith.constant dense<0.000000e+00> : vector<8x128xf32>
    %9 = tpu.matmul %8, %2, %cst_8 {dimension_numbers = #tpu.dot_dimension_numbers<[1], [0], [0], [1], [0, 0, 1, 1], [], []>} : vector<8x128xf32>, vector<128x128xf32>, vector<8x128xf32> -> vector<8x128xf32>
    %cst_9 = arith.constant 9.99999997E-7 : f32
    %10 = vector.broadcast %cst_9 : f32 to vector<8x128xf32>
    %11 = arith.addf %9, %10 : vector<8x128xf32>
    %12 = math.rsqrt %11 : vector<8x128xf32>
    %13 = arith.mulf %7, %12 : vector<8x128xf32>
    %14 = vector.extract_strided_slice %0 {offsets = [0, 0], sizes = [1, 128], strides = [1, 1]} : vector<12x128xf32> to vector<1x128xf32>
    %15 = vector.broadcast %14 : vector<1x128xf32> to vector<8x128xf32>
    %16 = arith.mulf %13, %15 : vector<8x128xf32>
    %17 = vector.extract_strided_slice %0 {offsets = [1, 0], sizes = [1, 128], strides = [1, 1]} : vector<12x128xf32> to vector<1x128xf32>
    %18 = vector.broadcast %17 : vector<1x128xf32> to vector<8x128xf32>
    %19 = arith.addf %16, %18 : vector<8x128xf32>
    %cst_10 = arith.constant dense<0.000000e+00> : vector<8x128xf32>
    %20 = tpu.matmul %19, %2, %cst_10 {dimension_numbers = #tpu.dot_dimension_numbers<[1], [0], [0], [1], [0, 0, 1, 1], [], []>} : vector<8x128xf32>, vector<128x128xf32>, vector<8x128xf32> -> vector<8x128xf32>
    %21 = arith.subf %19, %20 : vector<8x128xf32>
    %22 = arith.mulf %21, %21 : vector<8x128xf32>
    %cst_11 = arith.constant dense<0.000000e+00> : vector<8x128xf32>
    %23 = tpu.matmul %22, %2, %cst_11 {dimension_numbers = #tpu.dot_dimension_numbers<[1], [0], [0], [1], [0, 0, 1, 1], [], []>} : vector<8x128xf32>, vector<128x128xf32>, vector<8x128xf32> -> vector<8x128xf32>
    %cst_12 = arith.constant 9.99999997E-7 : f32
    %24 = vector.broadcast %cst_12 : f32 to vector<8x128xf32>
    %25 = arith.addf %23, %24 : vector<8x128xf32>
    %26 = math.rsqrt %25 : vector<8x128xf32>
    %27 = arith.mulf %21, %26 : vector<8x128xf32>
    %28 = vector.extract_strided_slice %0 {offsets = [2, 0], sizes = [1, 128], strides = [1, 1]} : vector<12x128xf32> to vector<1x128xf32>
    %29 = vector.broadcast %28 : vector<1x128xf32> to vector<8x128xf32>
    %30 = arith.mulf %27, %29 : vector<8x128xf32>
    %31 = vector.extract_strided_slice %0 {offsets = [3, 0], sizes = [1, 128], strides = [1, 1]} : vector<12x128xf32> to vector<1x128xf32>
    %32 = vector.broadcast %31 : vector<1x128xf32> to vector<8x128xf32>
    %33 = arith.addf %30, %32 : vector<8x128xf32>
    %c2 = arith.constant 2 : index
    %c0_13 = arith.constant 0 : index
    %c0_14 = arith.constant 0 : index
    %34 = vector.load %arg3[%c2, %c0_13, %c0_14] : memref<9x128x128xf32, #tpu.memory_space<vmem>>, vector<1x128x128xf32>
    %35 = vector.shape_cast %34 : vector<1x128x128xf32> to vector<128x128xf32>
    %cst_15 = arith.constant dense<0.000000e+00> : vector<8x128xf32>
    %36 = tpu.matmul %33, %35, %cst_15 {dimension_numbers = #tpu.dot_dimension_numbers<[1], [0], [0], [1], [0, 0, 1, 1], [], []>} : vector<8x128xf32>, vector<128x128xf32>, vector<8x128xf32> -> vector<8x128xf32>
    %37 = vector.extract_strided_slice %0 {offsets = [4, 0], sizes = [1, 128], strides = [1, 1]} : vector<12x128xf32> to vector<1x128xf32>
    %38 = vector.broadcast %37 : vector<1x128xf32> to vector<8x128xf32>
    %39 = arith.addf %36, %38 : vector<8x128xf32>
    %c3 = arith.constant 3 : index
    %c0_16 = arith.constant 0 : index
    %c0_17 = arith.constant 0 : index
    %40 = vector.load %arg3[%c3, %c0_16, %c0_17] : memref<9x128x128xf32, #tpu.memory_space<vmem>>, vector<1x128x128xf32>
    %41 = vector.shape_cast %40 : vector<1x128x128xf32> to vector<128x128xf32>
    %cst_18 = arith.constant dense<0.000000e+00> : vector<8x128xf32>
    %42 = tpu.matmul %33, %41, %cst_18 {dimension_numbers = #tpu.dot_dimension_numbers<[1], [0], [0], [1], [0, 0, 1, 1], [], []>} : vector<8x128xf32>, vector<128x128xf32>, vector<8x128xf32> -> vector<8x128xf32>
    %43 = vector.extract_strided_slice %0 {offsets = [5, 0], sizes = [1, 128], strides = [1, 1]} : vector<12x128xf32> to vector<1x128xf32>
    %44 = vector.broadcast %43 : vector<1x128xf32> to vector<8x128xf32>
    %45 = arith.addf %42, %44 : vector<8x128xf32>
    %c4 = arith.constant 4 : index
    %c0_19 = arith.constant 0 : index
    %c0_20 = arith.constant 0 : index
    %46 = vector.load %arg3[%c4, %c0_19, %c0_20] : memref<9x128x128xf32, #tpu.memory_space<vmem>>, vector<1x128x128xf32>
    %47 = vector.shape_cast %46 : vector<1x128x128xf32> to vector<128x128xf32>
    %cst_21 = arith.constant dense<0.000000e+00> : vector<8x128xf32>
    %48 = tpu.matmul %33, %47, %cst_21 {dimension_numbers = #tpu.dot_dimension_numbers<[1], [0], [0], [1], [0, 0, 1, 1], [], []>} : vector<8x128xf32>, vector<128x128xf32>, vector<8x128xf32> -> vector<8x128xf32>
    %49 = vector.extract_strided_slice %0 {offsets = [6, 0], sizes = [1, 128], strides = [1, 1]} : vector<12x128xf32> to vector<1x128xf32>
    %50 = vector.broadcast %49 : vector<1x128xf32> to vector<8x128xf32>
    %51 = arith.addf %48, %50 : vector<8x128xf32>
    %52 = arith.mulf %45, %39 : vector<8x128xf32>
    %cst_22 = arith.constant dense<0.000000e+00> : vector<8x128xf32>
    %53 = tpu.matmul %52, %4, %cst_22 {dimension_numbers = #tpu.dot_dimension_numbers<[1], [0], [0], [1], [0, 0, 1, 1], [], []>} : vector<8x128xf32>, vector<128x128xf32>, vector<8x128xf32> -> vector<8x128xf32>
    %cst_23 = arith.constant 0.353553385 : f32
    %54 = vector.broadcast %cst_23 : f32 to vector<8x128xf32>
    %55 = arith.mulf %53, %54 : vector<8x128xf32>
    %56 = arith.mulf %45, %39 : vector<8x128xf32>
    %cst_24 = arith.constant dense<0.000000e+00> : vector<8x128xf32>
    %57 = tpu.matmul %56, %4, %cst_24 {dimension_numbers = #tpu.dot_dimension_numbers<[1], [0], [0], [1], [0, 0, 1, 1], [], []>} : vector<8x128xf32>, vector<128x128xf32>, vector<8x128xf32> -> vector<8x128xf32>
    %cst_25 = arith.constant 0.353553385 : f32
    %58 = vector.broadcast %cst_25 : f32 to vector<8x128xf32>
    %59 = arith.mulf %57, %58 : vector<8x128xf32>
    %60 = arith.mulf %45, %39 : vector<8x128xf32>
    %cst_26 = arith.constant dense<0.000000e+00> : vector<8x128xf32>
    %61 = tpu.matmul %60, %4, %cst_26 {dimension_numbers = #tpu.dot_dimension_numbers<[1], [0], [0], [1], [0, 0, 1, 1], [], []>} : vector<8x128xf32>, vector<128x128xf32>, vector<8x128xf32> -> vector<8x128xf32>
    %cst_27 = arith.constant 0.353553385 : f32
    %62 = vector.broadcast %cst_27 : f32 to vector<8x128xf32>
    %63 = arith.mulf %61, %62 : vector<8x128xf32>
    %64 = arith.mulf %45, %39 : vector<8x128xf32>
    %cst_28 = arith.constant dense<0.000000e+00> : vector<8x128xf32>
    %65 = tpu.matmul %64, %4, %cst_28 {dimension_numbers = #tpu.dot_dimension_numbers<[1], [0], [0], [1], [0, 0, 1, 1], [], []>} : vector<8x128xf32>, vector<128x128xf32>, vector<8x128xf32> -> vector<8x128xf32>
    %cst_29 = arith.constant 0.353553385 : f32
    %66 = vector.broadcast %cst_29 : f32 to vector<8x128xf32>
    %67 = arith.mulf %65, %66 : vector<8x128xf32>
    %68 = arith.maximumf %55, %59 : vector<8x128xf32>
    %69 = arith.maximumf %68, %63 : vector<8x128xf32>
    %70 = arith.maximumf %69, %67 : vector<8x128xf32>
    %71 = arith.subf %55, %70 : vector<8x128xf32>
    %72 = math.exp %71 : vector<8x128xf32>
    %73 = arith.subf %59, %70 : vector<8x128xf32>
    %74 = math.exp %73 : vector<8x128xf32>
    %75 = arith.subf %63, %70 : vector<8x128xf32>
    %76 = math.exp %75 : vector<8x128xf32>
    %77 = arith.subf %67, %70 : vector<8x128xf32>
    %78 = math.exp %77 : vector<8x128xf32>
    %79 = arith.addf %72, %74 : vector<8x128xf32>
    %80 = arith.addf %79, %76 : vector<8x128xf32>
    %81 = arith.addf %80, %78 : vector<8x128xf32>
    %82 = tpu.reciprocal %81 {approx = true} : vector<8x128xf32> -> vector<8x128xf32>
    %83 = arith.mulf %81, %82 : vector<8x128xf32>
    %cst_30 = arith.constant 2.000000e+00 : f32
    %84 = vector.broadcast %cst_30 : f32 to vector<8x128xf32>
    %85 = arith.subf %84, %83 : vector<8x128xf32>
    %86 = arith.mulf %82, %85 : vector<8x128xf32>
    %87 = arith.mulf %72, %86 : vector<8x128xf32>
    %88 = arith.mulf %87, %51 : vector<8x128xf32>
    %89 = arith.mulf %74, %86 : vector<8x128xf32>
    %90 = arith.mulf %89, %51 : vector<8x128xf32>
    %91 = arith.addf %88, %90 : vector<8x128xf32>
    %92 = arith.mulf %76, %86 : vector<8x128xf32>
    %93 = arith.mulf %92, %51 : vector<8x128xf32>
    %94 = arith.addf %91, %93 : vector<8x128xf32>
    %95 = arith.mulf %78, %86 : vector<8x128xf32>
    %96 = arith.mulf %95, %51 : vector<8x128xf32>
    %97 = arith.addf %94, %96 : vector<8x128xf32>
    %c5 = arith.constant 5 : index
    %c0_31 = arith.constant 0 : index
    %c0_32 = arith.constant 0 : index
    %98 = vector.load %arg3[%c5, %c0_31, %c0_32] : memref<9x128x128xf32, #tpu.memory_space<vmem>>, vector<1x128x128xf32>
    %99 = vector.shape_cast %98 : vector<1x128x128xf32> to vector<128x128xf32>
    %cst_33 = arith.constant dense<0.000000e+00> : vector<8x128xf32>
    %100 = tpu.matmul %97, %99, %cst_33 {dimension_numbers = #tpu.dot_dimension_numbers<[1], [0], [0], [1], [0, 0, 1, 1], [], []>} : vector<8x128xf32>, vector<128x128xf32>, vector<8x128xf32> -> vector<8x128xf32>
    %c6 = arith.constant 6 : index
    %c0_34 = arith.constant 0 : index
    %c0_35 = arith.constant 0 : index
    %101 = vector.load %arg3[%c6, %c0_34, %c0_35] : memref<9x128x128xf32, #tpu.memory_space<vmem>>, vector<1x128x128xf32>
    %102 = vector.shape_cast %101 : vector<1x128x128xf32> to vector<128x128xf32>
    %cst_36 = arith.constant dense<0.000000e+00> : vector<8x128xf32>
    %103 = tpu.matmul %97, %102, %cst_36 {dimension_numbers = #tpu.dot_dimension_numbers<[1], [0], [0], [1], [0, 0, 1, 1], [], []>} : vector<8x128xf32>, vector<128x128xf32>, vector<8x128xf32> -> vector<8x128xf32>
    %104 = arith.addf %100, %103 : vector<8x128xf32>
    %105 = vector.extract_strided_slice %0 {offsets = [7, 0], sizes = [1, 128], strides = [1, 1]} : vector<12x128xf32> to vector<1x128xf32>
    %106 = vector.broadcast %105 : vector<1x128xf32> to vector<8x128xf32>
    %107 = arith.addf %104, %106 : vector<8x128xf32>
    %108 = arith.addf %107, %33 : vector<8x128xf32>
    %cst_37 = arith.constant dense<0.000000e+00> : vector<8x128xf32>
    %109 = tpu.matmul %108, %2, %cst_37 {dimension_numbers = #tpu.dot_dimension_numbers<[1], [0], [0], [1], [0, 0, 1, 1], [], []>} : vector<8x128xf32>, vector<128x128xf32>, vector<8x128xf32> -> vector<8x128xf32>
    %110 = arith.subf %108, %109 : vector<8x128xf32>
    %111 = arith.mulf %110, %110 : vector<8x128xf32>
    %cst_38 = arith.constant dense<0.000000e+00> : vector<8x128xf32>
    %112 = tpu.matmul %111, %2, %cst_38 {dimension_numbers = #tpu.dot_dimension_numbers<[1], [0], [0], [1], [0, 0, 1, 1], [], []>} : vector<8x128xf32>, vector<128x128xf32>, vector<8x128xf32> -> vector<8x128xf32>
    %cst_39 = arith.constant 9.99999997E-7 : f32
    %113 = vector.broadcast %cst_39 : f32 to vector<8x128xf32>
    %114 = arith.addf %112, %113 : vector<8x128xf32>
    %115 = math.rsqrt %114 : vector<8x128xf32>
    %116 = arith.mulf %110, %115 : vector<8x128xf32>
    %117 = vector.extract_strided_slice %0 {offsets = [8, 0], sizes = [1, 128], strides = [1, 1]} : vector<12x128xf32> to vector<1x128xf32>
    %118 = vector.broadcast %117 : vector<1x128xf32> to vector<8x128xf32>
    %119 = arith.mulf %116, %118 : vector<8x128xf32>
    %120 = vector.extract_strided_slice %0 {offsets = [9, 0], sizes = [1, 128], strides = [1, 1]} : vector<12x128xf32> to vector<1x128xf32>
    %121 = vector.broadcast %120 : vector<1x128xf32> to vector<8x128xf32>
    %122 = arith.addf %119, %121 : vector<8x128xf32>
    %c7 = arith.constant 7 : index
    %c0_40 = arith.constant 0 : index
    %c0_41 = arith.constant 0 : index
    %123 = vector.load %arg3[%c7, %c0_40, %c0_41] : memref<9x128x128xf32, #tpu.memory_space<vmem>>, vector<1x128x128xf32>
    %124 = vector.shape_cast %123 : vector<1x128x128xf32> to vector<128x128xf32>
    %cst_42 = arith.constant dense<0.000000e+00> : vector<8x128xf32>
    %125 = tpu.matmul %122, %124, %cst_42 {dimension_numbers = #tpu.dot_dimension_numbers<[1], [0], [0], [1], [0, 0, 1, 1], [], []>} : vector<8x128xf32>, vector<128x128xf32>, vector<8x128xf32> -> vector<8x128xf32>
    %126 = vector.extract_strided_slice %0 {offsets = [10, 0], sizes = [1, 128], strides = [1, 1]} : vector<12x128xf32> to vector<1x128xf32>
    %127 = vector.broadcast %126 : vector<1x128xf32> to vector<8x128xf32>
    %128 = arith.addf %125, %127 : vector<8x128xf32>
    %cst_43 = arith.constant 5.000000e-01 : f32
    %129 = vector.broadcast %cst_43 : f32 to vector<8x128xf32>
    %130 = arith.mulf %129, %128 : vector<8x128xf32>
    %cst_44 = arith.constant 0.707106769 : f32
    %131 = vector.broadcast %cst_44 : f32 to vector<8x128xf32>
    %132 = arith.mulf %128, %131 : vector<8x128xf32>
    %133 = math.absf %132 : vector<8x128xf32>
    %cst_45 = arith.constant 0.327591091 : f32
    %134 = vector.broadcast %cst_45 : f32 to vector<8x128xf32>
    %135 = arith.mulf %134, %133 : vector<8x128xf32>
    %cst_46 = arith.constant 1.000000e+00 : f32
    %136 = vector.broadcast %cst_46 : f32 to vector<8x128xf32>
    %137 = arith.addf %136, %135 : vector<8x128xf32>
    %cst_47 = arith.constant 1.000000e+00 : f32
    %138 = vector.broadcast %cst_47 : f32 to vector<8x128xf32>
    %139 = arith.divf %138, %137 : vector<8x128xf32>
    %cst_48 = arith.constant 1.06140542 : f32
    %140 = vector.broadcast %cst_48 : f32 to vector<8x128xf32>
    %141 = arith.mulf %139, %140 : vector<8x128xf32>
    %cst_49 = arith.constant -1.45315206 : f32
    %142 = vector.broadcast %cst_49 : f32 to vector<8x128xf32>
    %143 = arith.addf %142, %141 : vector<8x128xf32>
    %144 = arith.mulf %139, %143 : vector<8x128xf32>
    %cst_50 = arith.constant 1.42141378 : f32
    %145 = vector.broadcast %cst_50 : f32 to vector<8x128xf32>
    %146 = arith.addf %145, %144 : vector<8x128xf32>
    %147 = arith.mulf %139, %146 : vector<8x128xf32>
    %cst_51 = arith.constant -0.284496725 : f32
    %148 = vector.broadcast %cst_51 : f32 to vector<8x128xf32>
    %149 = arith.addf %148, %147 : vector<8x128xf32>
    %150 = arith.mulf %139, %149 : vector<8x128xf32>
    %cst_52 = arith.constant 0.254829586 : f32
    %151 = vector.broadcast %cst_52 : f32 to vector<8x128xf32>
    %152 = arith.addf %151, %150 : vector<8x128xf32>
    %153 = arith.mulf %139, %152 : vector<8x128xf32>
    %154 = arith.mulf %132, %132 : vector<8x128xf32>
    %cst_53 = arith.constant 0.000000e+00 : f32
    %155 = vector.broadcast %cst_53 : f32 to vector<8x128xf32>
    %156 = arith.subf %155, %154 : vector<8x128xf32>
    %157 = math.exp %156 : vector<8x128xf32>
    %158 = arith.mulf %153, %157 : vector<8x128xf32>
    %cst_54 = arith.constant 1.000000e+00 : f32
    %159 = vector.broadcast %cst_54 : f32 to vector<8x128xf32>
    %160 = arith.subf %159, %158 : vector<8x128xf32>
    %cst_55 = arith.constant 0.000000e+00 : f32
    %161 = vector.broadcast %cst_55 : f32 to vector<8x128xf32>
    %162 = arith.cmpf olt, %132, %161 : vector<8x128xf32>
    %cst_56 = arith.constant 0.000000e+00 : f32
    %163 = vector.broadcast %cst_56 : f32 to vector<8x128xf32>
    %164 = arith.subf %163, %160 : vector<8x128xf32>
    %165 = arith.select %162, %164, %160 : vector<8x128xi1>, vector<8x128xf32>
    %cst_57 = arith.constant 1.000000e+00 : f32
    %166 = vector.broadcast %cst_57 : f32 to vector<8x128xf32>
    %167 = arith.addf %166, %165 : vector<8x128xf32>
    %168 = arith.mulf %130, %167 : vector<8x128xf32>
    %c8 = arith.constant 8 : index
    %c0_58 = arith.constant 0 : index
    %c0_59 = arith.constant 0 : index
    %169 = vector.load %arg3[%c8, %c0_58, %c0_59] : memref<9x128x128xf32, #tpu.memory_space<vmem>>, vector<1x128x128xf32>
    %170 = vector.shape_cast %169 : vector<1x128x128xf32> to vector<128x128xf32>
    %cst_60 = arith.constant dense<0.000000e+00> : vector<8x128xf32>
    %171 = tpu.matmul %168, %170, %cst_60 {dimension_numbers = #tpu.dot_dimension_numbers<[1], [0], [0], [1], [0, 0, 1, 1], [], []>} : vector<8x128xf32>, vector<128x128xf32>, vector<8x128xf32> -> vector<8x128xf32>
    %172 = vector.extract_strided_slice %0 {offsets = [11, 0], sizes = [1, 128], strides = [1, 1]} : vector<12x128xf32> to vector<1x128xf32>
    %173 = vector.broadcast %172 : vector<1x128xf32> to vector<8x128xf32>
    %174 = arith.addf %171, %173 : vector<8x128xf32>
    %c0_61 = arith.constant 0 : index
    %c0_62 = arith.constant 0 : index
    %175 = vector.load %arg4[%c0_61, %c0_62] : memref<8x128xf32, #tpu.memory_space<vmem>>, vector<8x128xf32>
    tpu.vector_store %arg4[%c0_61, %c0_62], %174 {strides = array<i32>} : memref<8x128xf32, #tpu.memory_space<vmem>>, vector<8x128xf32>,
    return
  }
  func.func @transform_0(%arg0: i32) -> (i32, i32) {
    %c0_i32 = arith.constant 0 : i32
    %c0_i32_0 = arith.constant 0 : i32
    return %arg0, %c0_i32 : i32, i32
  }
  func.func @transform_1(%arg0: i32) -> (i32, i32) {
    %c0_i32 = arith.constant 0 : i32
    %c0_i32_0 = arith.constant 0 : i32
    %c0_i32_1 = arith.constant 0 : i32
    return %c0_i32, %c0_i32_0 : i32, i32
  }
  func.func @transform_2(%arg0: i32) -> (i32, i32, i32) {
    %c0_i32 = arith.constant 0 : i32
    %c0_i32_0 = arith.constant 0 : i32
    %c0_i32_1 = arith.constant 0 : i32
    %c0_i32_2 = arith.constant 0 : i32
    return %c0_i32, %c0_i32_0, %c0_i32_1 : i32, i32, i32
  }
  func.func @transform_3(%arg0: i32) -> (i32, i32) {
    %c0_i32 = arith.constant 0 : i32
    %c0_i32_0 = arith.constant 0 : i32
    return %arg0, %c0_i32 : i32, i32
  }
}

</mosaic_0001>

<llo_original>
// kernel: tile.67
$region0: #{tile.67}
  #allocation0 [shape = 's32[1]{0}', space=sflag, size = 0x4, scoped, tag = 'scoped memory for tile.67']
  %s0 = inlined_call_operand.vmem [shape: f32[32], index: 0, kind: input, shape index: {}]
  %s1 = inlined_call_operand.vmem [shape: f32[4,32], index: 1, kind: output, shape index: {}]
  // Predicated region
  $region2: #{tile.67} parent=0 // pred_check
    _
  $region3: #{tile.67} parent=0 // pred_check_branch
    %3 = sbr.rel (0) target = $region5
  $region4: #{tile.67} parent=0 // pred_region
    _
  $region5: #{tile.67} parent=0 // pred_fallthru
    _
  %v4 = vld [vmem:[%s0] ss:$0 sm:$0xff]
  %5 = vst [vmem:[%s1] sm:$0xf] %v4

// kernel: tile.109
$region0: #{tile.109}
  %s0 = inlined_call_operand.vmem [shape: f32[4,32], index: 0, kind: input, shape index: {}]
  %s1 = inlined_call_operand.vmem [shape: f32[1,128], index: 1, kind: output, shape index: {}]
  $region1: #{tile.109} parent=0
    #allocation0 [shape = 'u8[4096]{0}', space=vmem, size = 0x1000, scoped, tag = 'scoped mem for output reshape']
    #allocation1 [shape = 'u8[4096]{0}', space=vmem, size = 0x1000, scoped, tag = 'scoped mem for input reshape']
    %s3 = sshllo.u32 0, 4
    %v4 = vld [vmem:[%s0] sm:%s3]
    %5 = vst [vmem:[#allocation1] sm:%s3] %v4
    %v6 = vld [vmem:[#allocation1] sm:$0x1]
    %vm7 = vcmask 261120
    %8 = vst.msk [vmem:[#allocation0] sm:$0x1] %vm7, %v6
    %s9 = scalar_lea.vmem [#allocation1], 3
    %v10 = vld [vmem:[%s9] sm:$0x1]
    %11 = vrot.lane.b32.xlu0 %v10, 96
    %v12 = vpop.permute.xlu0 %11
    %vm13 = vcmask 1048320
    %14 = vst.msk [vmem:[#allocation0] sm:$0x1] %vm13, %v12
    %s15 = scalar_lea.vmem [#allocation1], 2
    %v16 = vld [vmem:[%s15] sm:$0x1]
    %17 = vrot.lane.b32.xlu0 %v16, 64
    %v18 = vpop.permute.xlu0 %17
    %vm19 = vcmask 785920
    %20 = vst.msk [vmem:[#allocation0] sm:$0x1] %vm19, %v18
    %s21 = scalar_lea.vmem [#allocation1], 1
    %v22 = vld [vmem:[%s21] sm:$0x1]
    %23 = vrot.lane.b32.xlu0 %v22, 32
    %v24 = vpop.permute.xlu0 %23
    %vm25 = vcmask 523520
    %26 = vst.msk [vmem:[#allocation0] sm:$0x1] %vm25, %v24
    %s28 = sshllo.u32 0, 1
    %v30 = vld [vmem:[#allocation0] sm:%s28]
    %s31 = sshllo.u32 0, 1
    %32 = vst [vmem:[%s1] sm:%s31] %v30

// kernel: encoder_forward.1
$region0: #{encoder_forward.1}
  #allocation0 [shape = 'u32[]', space=smem, size = 0x4, offset = 0x4, fixed_abs, tag = 'smem constant byte address 0x4 - core index']
  #allocation1 [shape = 'u32[144,128]{1,0:T(1,128)}', space=vmem, size = 0x12000, scoped, tag = 'internal scratch']
  %s0 = inlined_call_operand.vmem [shape: f32[16,128], index: 0, kind: input, shape index: {}]
  %s1 = inlined_call_operand.vmem [shape: f32[12,128], index: 1, kind: input, shape index: {}]
  %s2 = inlined_call_operand.vmem [shape: f32[9,128,128], index: 2, kind: input, shape index: {}]
  %s3 = inlined_call_operand.vmem [shape: f32[16,128], index: 3, kind: output, shape index: {}]
  %s4 = sld [smem:[#allocation0]]
  $region45: #{encoder_forward.1} parent=0
    _
  %s6 = ssub.s32 1, %s4
  %s7 = scalar_select 0, %s6, %s4
  loop: start=0, step=1, limit=4
  $region2: #{encoder_forward.1} parent=0 // loop_pre_header
    _
  $region3: #{encoder_forward.1} parent=0 // loop_header
    %s9 = sphi 0, %s13
    %p10 = scmp.ge.s32.totalorder %s9, 4
    %s19 = sphi 0, %s21
    %s22 = sphi 0, %s19
    %s23 = sphi 0, %s22
    %s39 = sphi 0, %s23
    %s43 = sphi 0, %s43
    %s45 = sphi 0, %s43
    %s46 = sphi 0, %s45
    %s60 = sphi 0, %s46
    %s64 = sphi 0, %s64
    %s66 = sphi 0, %s64
    %s67 = sphi 0, %s66
    %s81 = sphi 0, %s67
    %s87 = sphi 0, %s89
    %s90 = sphi 0, %s87
    %s91 = sphi 0, %s90
    %s107 = sphi 0, %s91
  $region4: #{encoder_forward.1} parent=0 // loop_header_branch
    %12 = sbr.rel (%p10) target = $region8
  $region5: #{encoder_forward.1} parent=0 // loop_body
    %s14 = ssub.s32 %s9, 1
    %s15 = ssub.s32 %s9, 2
    %s16 = sadd.s32 %s9, 1
    %s17 = ssub.s32 %s9, %s16
    %p18 = scmp.eq.s32.totalorder %s17, 0
    %s20 = sadd.s32 %s19, 1
    %s21 = scalar_select %p18, %s19, %s20
    %p24 = pneg %p18
    %p25 = scmp.eq.s32.totalorder %s9, 1
    %p26 = por %p24, %p25
    %p27 = scmp.ne.s32.totalorder %s19, %s22
    %p28 = scmp.eq.s32.totalorder %s9, 0
    %p29 = por %p27, %p28
    %p30 = scmp.ne.s32.totalorder %s19, %s22
    %p31 = scmp.eq.s32.totalorder %s14, 1
    %p32 = por %p30, %p31
    %p33 = scmp.ne.s32.totalorder %s22, %s23
    %p34 = scmp.eq.s32.totalorder %s14, 0
    %p35 = por %p33, %p34
    %p36 = scmp.ne.s32.totalorder %s22, %s23
    %p37 = scmp.eq.s32.totalorder %s15, 1
    %p38 = por %p36, %p37
    %p40 = scmp.ne.s32.totalorder %s23, %s39
    %p41 = scmp.eq.s32.totalorder %s15, 0
    %p42 = por %p40, %p41
    %s44 = sadd.s32 %s43, 1
    %p47 = scmp.eq.s32.totalorder %s9, 1
    %p48 = scmp.ne.s32.totalorder %s43, %s45
    %p49 = scmp.eq.s32.totalorder %s9, 0
    %p50 = por %p48, %p49
    %p51 = scmp.ne.s32.totalorder %s43, %s45
    %p52 = scmp.eq.s32.totalorder %s14, 1
    %p53 = por %p51, %p52
    %p54 = scmp.ne.s32.totalorder %s45, %s46
    %p55 = scmp.eq.s32.totalorder %s14, 0
    %p56 = por %p54, %p55
    %p57 = scmp.ne.s32.totalorder %s45, %s46
    %p58 = scmp.eq.s32.totalorder %s15, 1
    %p59 = por %p57, %p58
    %p61 = scmp.ne.s32.totalorder %s46, %s60
    %p62 = scmp.eq.s32.totalorder %s15, 0
    %p63 = por %p61, %p62
    %s65 = sadd.s32 %s64, 1
    %p68 = scmp.eq.s32.totalorder %s9, 1
    %p69 = scmp.ne.s32.totalorder %s64, %s66
    %p70 = scmp.eq.s32.totalorder %s9, 0
    %p71 = por %p69, %p70
    %p72 = scmp.ne.s32.totalorder %s64, %s66
    %p73 = scmp.eq.s32.totalorder %s14, 1
    %p74 = por %p72, %p73
    %p75 = scmp.ne.s32.totalorder %s66, %s67
    %p76 = scmp.eq.s32.totalorder %s14, 0
    %p77 = por %p75, %p76
    %p78 = scmp.ne.s32.totalorder %s66, %s67
    %p79 = scmp.eq.s32.totalorder %s15, 1
    %p80 = por %p78, %p79
    %p82 = scmp.ne.s32.totalorder %s67, %s81
    %p83 = scmp.eq.s32.totalorder %s15, 0
    %p84 = por %p82, %p83
    %s85 = ssub.s32 %s9, %s16
    %p86 = scmp.eq.s32.totalorder %s85, 0
    %s88 = sadd.s32 %s87, 1
    %s89 = scalar_select %p86, %s87, %s88
    %p92 = pneg %p86
    %p93 = scmp.eq.s32.totalorder %s9, 1
    %p94 = por %p92, %p93
    %p95 = scmp.ne.s32.totalorder %s87, %s90
    %p96 = scmp.eq.s32.totalorder %s9, 0
    %p97 = por %p95, %p96
    %p98 = scmp.ne.s32.totalorder %s87, %s90
    %p99 = scmp.eq.s32.totalorder %s14, 1
    %p100 = por %p98, %p99
    %p101 = scmp.ne.s32.totalorder %s90, %s91
    %p102 = scmp.eq.s32.totalorder %s14, 0
    %p103 = por %p101, %p102
    %p104 = scmp.ne.s32.totalorder %s90, %s91
    %p105 = scmp.eq.s32.totalorder %s15, 1
    %p106 = por %p104, %p105
    %p108 = scmp.ne.s32.totalorder %s91, %s107
    %p109 = scmp.eq.s32.totalorder %s15, 0
    %p110 = por %p108, %p109
    %p111 = scmp.le.s32.totalorder 1, %s9
    %p112 = scmp.lt.s32.totalorder %s9, 3
    %p113 = pnand %p111, %p112
    %p114 = pneg %p113
    // Predicated region
    $region9: #{encoder_forward.1} parent=5 // pred_check
      _
    $region10: #{encoder_forward.1} parent=5 // pred_check_branch
      %116 = sbr.rel (%p113) target = $region12
    $region11: #{encoder_forward.1} parent=5 // pred_region
      %s117 = ssub.s32 %s9, 1
      // Predicated region
      $region13: #{encoder_forward.1} parent=11 // pred_check
        %p118 = pneg %p56
      $region14: #{encoder_forward.1} parent=11 // pred_check_branch
        %120 = sbr.rel (%p118) target = $region16
      $region15: #{encoder_forward.1} parent=11 // pred_region
        _
      $region16: #{encoder_forward.1} parent=11 // pred_fallthru
        _
      // Predicated region
      $region17: #{encoder_forward.1} parent=11 // pred_check
        %p121 = pneg %p77
      $region18: #{encoder_forward.1} parent=11 // pred_check_branch
        %123 = sbr.rel (%p121) target = $region20
      $region19: #{encoder_forward.1} parent=11 // pred_region
        _
      $region20: #{encoder_forward.1} parent=11 // pred_fallthru
        _
    $region12: #{encoder_forward.1} parent=5 // pred_fallthru
      _
    %p124 = scmp.lt.s32.totalorder %s9, 2
    // Predicated region
    $region21: #{encoder_forward.1} parent=5 // pred_check
      %p125 = pneg %p124
    $region22: #{encoder_forward.1} parent=5 // pred_check_branch
      %127 = sbr.rel (%p125) target = $region24
    $region23: #{encoder_forward.1} parent=5 // pred_region
      // Predicated region
      $region25: #{encoder_forward.1} parent=23 // pred_check
        %p128 = pneg %p29
      $region26: #{encoder_forward.1} parent=23 // pred_check_branch
        %130 = sbr.rel (%p128) target = $region28
      $region27: #{encoder_forward.1} parent=23 // pred_region
        %p131 = scmp.lt.s32.totalorder %s9, 1
        %s132 = scalar_select %p131, %s9, 1
        %s133 = smul.addr %s132, 8
        %s134 = scalar_lea.vmem %s0, %s133
      $region28: #{encoder_forward.1} parent=23 // pred_fallthru
        _
    $region24: #{encoder_forward.1} parent=5 // pred_fallthru
      _
    %p135 = scmp.le.s32.totalorder 1, %s9
    %p136 = scmp.lt.s32.totalorder %s9, 3
    %p137 = pnand %p135, %p136
    %p138 = pneg %p137
    // Predicated region
    $region29: #{encoder_forward.1} parent=5 // pred_check
      _
    $region30: #{encoder_forward.1} parent=5 // pred_check_branch
      %140 = sbr.rel (%p137) target = $region32
    $region31: #{encoder_forward.1} parent=5 // pred_region
      %s141 = ssub.s32 %s9, 1
      %p142 = scmp.lt.s32.totalorder %s14, 1
      %s143 = scalar_select %p142, %s14, 1
      %s144 = smul.addr %s143, 8
      %s145 = scalar_lea.vmem %s0, %s144
      %p146 = pneg %p35
      %p147 = pneg %p32
      %p148 = pneg %p56
      %p149 = pneg %p53
      %p150 = pneg %p77
      %p151 = pneg %p74
      %p152 = pneg %p103
      %p153 = pneg %p100
      %p154 = scmp.lt.s32.totalorder %s14, 1
      %s155 = scalar_select %p154, %s14, 1
      %s156 = smul.addr %s155, 8
      %s157 = scalar_lea.vmem %s3, %s156
      %p158 = scmp.lt.s32.totalorder %s14, 1
      %s159 = scalar_select %p158, %s14, 1
      %s160 = smul.addr %s159, 8
      %s161 = scalar_lea.vmem %s0, %s160
      %p162 = scmp.lt.s32.totalorder %s14, 1
      %s163 = scalar_select %p162, %s14, 1
      %s164 = smul.addr %s163, 8
      %s165 = scalar_lea.vmem %s3, %s164
      %v166 = vld [vmem:[%s1] sm:$0xff]
      %v167 = vld [vmem:[%s1 + $0x8] sm:$0xf]
      %v168 = vld [vmem:[%s2] sm:$0xff]
      %v169 = vld [vmem:[%s2 + $0x8] sm:$0xff]
      %v170 = vld [vmem:[%s2 + $0x10] sm:$0xff]
      %v171 = vld [vmem:[%s2 + $0x18] sm:$0xff]
      %v172 = vld [vmem:[%s2 + $0x20] sm:$0xff]
      %v173 = vld [vmem:[%s2 + $0x28] sm:$0xff]
      %v174 = vld [vmem:[%s2 + $0x30] sm:$0xff]
      %v175 = vld [vmem:[%s2 + $0x38] sm:$0xff]
      %v176 = vld [vmem:[%s2 + $0x40] sm:$0xff]
      %v177 = vld [vmem:[%s2 + $0x48] sm:$0xff]
      %v178 = vld [vmem:[%s2 + $0x50] sm:$0xff]
      %v179 = vld [vmem:[%s2 + $0x58] sm:$0xff]
      %v180 = vld [vmem:[%s2 + $0x60] sm:$0xff]
      %v181 = vld [vmem:[%s2 + $0x68] sm:$0xff]
      %v182 = vld [vmem:[%s2 + $0x70] sm:$0xff]
      %v183 = vld [vmem:[%s2 + $0x78] sm:$0xff]
      %s184 = scalar_lea.vmem %s2, 128
      %v185 = vld [vmem:[%s184] sm:$0xff]
      %v186 = vld [vmem:[%s184 + $0x8] sm:$0xff]
      %v187 = vld [vmem:[%s184 + $0x10] sm:$0xff]
      %v188 = vld [vmem:[%s184 + $0x18] sm:$0xff]
      %v189 = vld [vmem:[%s184 + $0x20] sm:$0xff]
      %v190 = vld [vmem:[%s184 + $0x28] sm:$0xff]
      %v191 = vld [vmem:[%s184 + $0x30] sm:$0xff]
      %v192 = vld [vmem:[%s184 + $0x38] sm:$0xff]
      %v193 = vld [vmem:[%s184 + $0x40] sm:$0xff]
      %v194 = vld [vmem:[%s184 + $0x48] sm:$0xff]
      %v195 = vld [vmem:[%s184 + $0x50] sm:$0xff]
      %v196 = vld [vmem:[%s184 + $0x58] sm:$0xff]
      %v197 = vld [vmem:[%s184 + $0x60] sm:$0xff]
      %v198 = vld [vmem:[%s184 + $0x68] sm:$0xff]
      %v199 = vld [vmem:[%s184 + $0x70] sm:$0xff]
      %v200 = vld [vmem:[%s184 + $0x78] sm:$0xff]
      %v201 = vld [vmem:[%s161] sm:$0xff]
      %202 = vmatprep.subr.mxu0 0.0
      %203 = vmatpush1.msra.mxu0 %v168
      %204 = vmatprep.subr.mxu0 0.0
      %205 = vmatpush1.msra.mxu0 %v169
      %206 = vmatprep.subr.mxu0 0.0
      %207 = vmatpush1.msra.mxu0 %v170
      %208 = vmatprep.subr.mxu0 0.0
      %209 = vmatpush1.msra.mxu0 %v171
      %210 = vmatprep.subr.mxu0 0.0
      %211 = vmatpush1.msra.mxu0 %v172
      %212 = vmatprep.subr.mxu0 0.0
      %213 = vmatpush1.msra.mxu0 %v173
      %214 = vmatprep.subr.mxu0 0.0
      %215 = vmatpush1.msra.mxu0 %v174
      %216 = vmatprep.subr.mxu0 0.0
      %217 = vmatpush1.msra.mxu0 %v175
      %218 = vmatprep.subr.mxu0 0.0
      %219 = vmatpush1.msra.mxu0 %v176
      %220 = vmatprep.subr.mxu0 0.0
      %221 = vmatpush1.msra.mxu0 %v177
      %222 = vmatprep.subr.mxu0 0.0
      %223 = vmatpush1.msra.mxu0 %v178
      %224 = vmatprep.subr.mxu0 0.0
      %225 = vmatpush1.msra.mxu0 %v179
      %226 = vmatprep.subr.mxu0 0.0
      %227 = vmatpush1.msra.mxu0 %v180
      %228 = vmatprep.subr.mxu0 0.0
      %229 = vmatpush1.msra.mxu0 %v181
      %230 = vmatprep.subr.mxu0 0.0
      %231 = vmatpush1.msra.mxu0 %v182
      %232 = vmatprep.subr.mxu0 0.0
      %233 = vmatpush1.msra.mxu0 %v183
      %234 = vmatprep.subr.mxu0 0.0
      %235 = vmatpush1.msra.mxu0 0.0
      %236 = vmatprep.subr.mxu0 0.0
      %237 = vmatpush1.msra.mxu0 0.0
      %238 = vmatprep.subr.mxu0 0.0
      %239 = vmatpush1.msra.mxu0 0.0
      %240 = vmatprep.subr.mxu0 0.0
      %241 = vmatpush1.msra.mxu0 0.0
      %242 = vmatprep.subr.mxu0 0.0
      %243 = vmatpush1.msra.mxu0 0.0
      %244 = vmatprep.subr.mxu0 0.0
      %245 = vmatpush1.msra.mxu0 0.0
      %246 = vmatprep.subr.mxu0 0.0
      %247 = vmatpush1.msra.mxu0 0.0
      %248 = vmatprep.subr.mxu0 0.0
      %249 = vmatpush1.msra.mxu0 0.0
      %250 = vmatprep.subr.mxu0 0.0
      %251 = vmatpush1.msra.mxu0 0.0
      %252 = vmatprep.subr.mxu0 0.0
      %253 = vmatpush1.msra.mxu0 0.0
      %254 = vmatprep.subr.mxu0 0.0
      %255 = vmatpush1.msra.mxu0 0.0
      %256 = vmatprep.subr.mxu0 0.0
      %257 = vmatpush1.msra.mxu0 0.0
      %258 = vmatprep.subr.mxu0 0.0
      %259 = vmatpush1.msra.mxu0 0.0
      %260 = vmatprep.subr.mxu0 0.0
      %261 = vmatpush1.msra.mxu0 0.0
      %262 = vmatprep.subr.mxu0 0.0
      %263 = vmatpush1.msra.mxu0 0.0
      %264 = vmatprep.subr.mxu0 0.0
      %265 = vmatpush1.msra.mxu0 0.0
      %266 = vmatprep.mubr.f32.mxu0 0.0
      %267 = vmatmul.mubr.f32.gmra.mrb[0].mxu0 %v201
      %v268 = vpop.f32.mrb[0].mxu0
      %v269 = vadd.f32 0.0, %v268
      %v270 = vpop.f32.mrb[0].mxu0
      %271 = vdwg.mxu0
      %v272 = vsub.f32 %v201, %v269
      %v273 = vmul.f32 %v272, %v272
      %274 = vmatprep.subr.mxu0 0.0
      %275 = vmatpush1.msra.mxu0 %v168
      %276 = vmatprep.subr.mxu0 0.0
      %277 = vmatpush1.msra.mxu0 %v169
      %278 = vmatprep.subr.mxu0 0.0
      %279 = vmatpush1.msra.mxu0 %v170
      %280 = vmatprep.subr.mxu0 0.0
      %281 = vmatpush1.msra.mxu0 %v171
      %282 = vmatprep.subr.mxu0 0.0
      %283 = vmatpush1.msra.mxu0 %v172
      %284 = vmatprep.subr.mxu0 0.0
      %285 = vmatpush1.msra.mxu0 %v173
      %286 = vmatprep.subr.mxu0 0.0
      %287 = vmatpush1.msra.mxu0 %v174
      %288 = vmatprep.subr.mxu0 0.0
      %289 = vmatpush1.msra.mxu0 %v175
      %290 = vmatprep.subr.mxu0 0.0
      %291 = vmatpush1.msra.mxu0 %v176
      %292 = vmatprep.subr.mxu0 0.0
      %293 = vmatpush1.msra.mxu0 %v177
      %294 = vmatprep.subr.mxu0 0.0
      %295 = vmatpush1.msra.mxu0 %v178
      %296 = vmatprep.subr.mxu0 0.0
      %297 = vmatpush1.msra.mxu0 %v179
      %298 = vmatprep.subr.mxu0 0.0
      %299 = vmatpush1.msra.mxu0 %v180
      %300 = vmatprep.subr.mxu0 0.0
      %301 = vmatpush1.msra.mxu0 %v181
      %302 = vmatprep.subr.mxu0 0.0
      %303 = vmatpush1.msra.mxu0 %v182
      %304 = vmatprep.subr.mxu0 0.0
      %305 = vmatpush1.msra.mxu0 %v183
      %306 = vmatprep.subr.mxu0 0.0
      %307 = vmatpush1.msra.mxu0 0.0
      %308 = vmatprep.subr.mxu0 0.0
      %309 = vmatpush1.msra.mxu0 0.0
      %310 = vmatprep.subr.mxu0 0.0
      %311 = vmatpush1.msra.mxu0 0.0
      %312 = vmatprep.subr.mxu0 0.0
      %313 = vmatpush1.msra.mxu0 0.0
      %314 = vmatprep.subr.mxu0 0.0
      %315 = vmatpush1.msra.mxu0 0.0
      %316 = vmatprep.subr.mxu0 0.0
      %317 = vmatpush1.msra.mxu0 0.0
      %318 = vmatprep.subr.mxu0 0.0
      %319 = vmatpush1.msra.mxu0 0.0
      %320 = vmatprep.subr.mxu0 0.0
      %321 = vmatpush1.msra.mxu0 0.0
      %322 = vmatprep.subr.mxu0 0.0
      %323 = vmatpush1.msra.mxu0 0.0
      %324 = vmatprep.subr.mxu0 0.0
      %325 = vmatpush1.msra.mxu0 0.0
      %326 = vmatprep.subr.mxu0 0.0
      %327 = vmatpush1.msra.mxu0 0.0
      %328 = vmatprep.subr.mxu0 0.0
      %329 = vmatpush1.msra.mxu0 0.0
      %330 = vmatprep.subr.mxu0 0.0
      %331 = vmatpush1.msra.mxu0 0.0
      %332 = vmatprep.subr.mxu0 0.0
      %333 = vmatpush1.msra.mxu0 0.0
      %334 = vmatprep.subr.mxu0 0.0
      %335 = vmatpush1.msra.mxu0 0.0
      %336 = vmatprep.subr.mxu0 0.0
      %337 = vmatpush1.msra.mxu0 0.0
      %338 = vmatprep.mubr.f32.mxu0 0.0
      %339 = vmatmul.mubr.f32.gmra.mrb[0].mxu0 %v273
      %v340 = vpop.f32.mrb[0].mxu0
      %v341 = vadd.f32 1e-06, %v340
      %v342 = vpop.f32.mrb[0].mxu0
      %343 = vdwg.mxu0
      %v344 = vrsqrt.pop %v341
      %v345 = vmul.f32 %v272, %v344
      %v346 = vlaneseq
      %v347 = vshrl.u32 %v346, 7
      %v348 = vsub.s32 0, %v347
      %v349 = vrot.slane %v166, %v348
      %v350 = vmul.f32 %v345, %v349
      %v351 = vlaneseq
      %v352 = vshrl.u32 %v351, 7
      %v353 = vsub.s32 1, %v352
      %v354 = vrot.slane %v166, %v353
      %v355 = vadd.f32 %v350, %v354
      %356 = vmatprep.subr.mxu0 0.0
      %357 = vmatpush1.msra.mxu0 %v168
      %358 = vmatprep.subr.mxu0 0.0
      %359 = vmatpush1.msra.mxu0 %v169
      %360 = vmatprep.subr.mxu0 0.0
      %361 = vmatpush1.msra.mxu0 %v170
      %362 = vmatprep.subr.mxu0 0.0
      %363 = vmatpush1.msra.mxu0 %v171
      %364 = vmatprep.subr.mxu0 0.0
      %365 = vmatpush1.msra.mxu0 %v172
      %366 = vmatprep.subr.mxu0 0.0
      %367 = vmatpush1.msra.mxu0 %v173
      %368 = vmatprep.subr.mxu0 0.0
      %369 = vmatpush1.msra.mxu0 %v174
      %370 = vmatprep.subr.mxu0 0.0
      %371 = vmatpush1.msra.mxu0 %v175
      %372 = vmatprep.subr.mxu0 0.0
      %373 = vmatpush1.msra.mxu0 %v176
      %374 = vmatprep.subr.mxu0 0.0
      %375 = vmatpush1.msra.mxu0 %v177
      %376 = vmatprep.subr.mxu0 0.0
      %377 = vmatpush1.msra.mxu0 %v178
      %378 = vmatprep.subr.mxu0 0.0
      %379 = vmatpush1.msra.mxu0 %v179
      %380 = vmatprep.subr.mxu0 0.0
      %381 = vmatpush1.msra.mxu0 %v180
      %382 = vmatprep.subr.mxu0 0.0
      %383 = vmatpush1.msra.mxu0 %v181
      %384 = vmatprep.subr.mxu0 0.0
      %385 = vmatpush1.msra.mxu0 %v182
      %386 = vmatprep.subr.mxu0 0.0
      %387 = vmatpush1.msra.mxu0 %v183
      %388 = vmatprep.subr.mxu0 0.0
      %389 = vmatpush1.msra.mxu0 0.0
      %390 = vmatprep.subr.mxu0 0.0
      %391 = vmatpush1.msra.mxu0 0.0
      %392 = vmatprep.subr.mxu0 0.0
      %393 = vmatpush1.msra.mxu0 0.0
      %394 = vmatprep.subr.mxu0 0.0
      %395 = vmatpush1.msra.mxu0 0.0
      %396 = vmatprep.subr.mxu0 0.0
      %397 = vmatpush1.msra.mxu0 0.0
      %398 = vmatprep.subr.mxu0 0.0
      %399 = vmatpush1.msra.mxu0 0.0
      %400 = vmatprep.subr.mxu0 0.0
      %401 = vmatpush1.msra.mxu0 0.0
      %402 = vmatprep.subr.mxu0 0.0
      %403 = vmatpush1.msra.mxu0 0.0
      %404 = vmatprep.subr.mxu0 0.0
      %405 = vmatpush1.msra.mxu0 0.0
      %406 = vmatprep.subr.mxu0 0.0
      %407 = vmatpush1.msra.mxu0 0.0
      %408 = vmatprep.subr.mxu0 0.0
      %409 = vmatpush1.msra.mxu0 0.0
      %410 = vmatprep.subr.mxu0 0.0
      %411 = vmatpush1.msra.mxu0 0.0
      %412 = vmatprep.subr.mxu0 0.0
      %413 = vmatpush1.msra.mxu0 0.0
      %414 = vmatprep.subr.mxu0 0.0
      %415 = vmatpush1.msra.mxu0 0.0
      %416 = vmatprep.subr.mxu0 0.0
      %417 = vmatpush1.msra.mxu0 0.0
      %418 = vmatprep.subr.mxu0 0.0
      %419 = vmatpush1.msra.mxu0 0.0
      %420 = vmatprep.mubr.f32.mxu0 0.0
      %421 = vmatmul.mubr.f32.gmra.mrb[0].mxu0 %v355
      %v422 = vpop.f32.mrb[0].mxu0
      %v423 = vadd.f32 0.0, %v422
      %v424 = vpop.f32.mrb[0].mxu0
      %425 = vdwg.mxu0
      %v426 = vsub.f32 %v355, %v423
      %v427 = vmul.f32 %v426, %v426
      %428 = vmatprep.subr.mxu0 0.0
      %429 = vmatpush1.msra.mxu0 %v168
      %430 = vmatprep.subr.mxu0 0.0
      %431 = vmatpush1.msra.mxu0 %v169
      %432 = vmatprep.subr.mxu0 0.0
      %433 = vmatpush1.msra.mxu0 %v170
      %434 = vmatprep.subr.mxu0 0.0
      %435 = vmatpush1.msra.mxu0 %v171
      %436 = vmatprep.subr.mxu0 0.0
      %437 = vmatpush1.msra.mxu0 %v172
      %438 = vmatprep.subr.mxu0 0.0
      %439 = vmatpush1.msra.mxu0 %v173
      %440 = vmatprep.subr.mxu0 0.0
      %441 = vmatpush1.msra.mxu0 %v174
      %442 = vmatprep.subr.mxu0 0.0
      %443 = vmatpush1.msra.mxu0 %v175
      %444 = vmatprep.subr.mxu0 0.0
      %445 = vmatpush1.msra.mxu0 %v176
      %446 = vmatprep.subr.mxu0 0.0
      %447 = vmatpush1.msra.mxu0 %v177
      %448 = vmatprep.subr.mxu0 0.0
      %449 = vmatpush1.msra.mxu0 %v178
      %450 = vmatprep.subr.mxu0 0.0
      %451 = vmatpush1.msra.mxu0 %v179
      %452 = vmatprep.subr.mxu0 0.0
      %453 = vmatpush1.msra.mxu0 %v180
      %454 = vmatprep.subr.mxu0 0.0
      %455 = vmatpush1.msra.mxu0 %v181
      %456 = vmatprep.subr.mxu0 0.0
      %457 = vmatpush1.msra.mxu0 %v182
      %458 = vmatprep.subr.mxu0 0.0
      %459 = vmatpush1.msra.mxu0 %v183
      %460 = vmatprep.subr.mxu0 0.0
      %461 = vmatpush1.msra.mxu0 0.0
      %462 = vmatprep.subr.mxu0 0.0
      %463 = vmatpush1.msra.mxu0 0.0
      %464 = vmatprep.subr.mxu0 0.0
      %465 = vmatpush1.msra.mxu0 0.0
      %466 = vmatprep.subr.mxu0 0.0
      %467 = vmatpush1.msra.mxu0 0.0
      %468 = vmatprep.subr.mxu0 0.0
      %469 = vmatpush1.msra.mxu0 0.0
      %470 = vmatprep.subr.mxu0 0.0
      %471 = vmatpush1.msra.mxu0 0.0
      %472 = vmatprep.subr.mxu0 0.0
      %473 = vmatpush1.msra.mxu0 0.0
      %474 = vmatprep.subr.mxu0 0.0
      %475 = vmatpush1.msra.mxu0 0.0
      %476 = vmatprep.subr.mxu0 0.0
      %477 = vmatpush1.msra.mxu0 0.0
      %478 = vmatprep.subr.mxu0 0.0
      %479 = vmatpush1.msra.mxu0 0.0
      %480 = vmatprep.subr.mxu0 0.0
      %481 = vmatpush1.msra.mxu0 0.0
      %482 = vmatprep.subr.mxu0 0.0
      %483 = vmatpush1.msra.mxu0 0.0
      %484 = vmatprep.subr.mxu0 0.0
      %485 = vmatpush1.msra.mxu0 0.0
      %486 = vmatprep.subr.mxu0 0.0
      %487 = vmatpush1.msra.mxu0 0.0
      %488 = vmatprep.subr.mxu0 0.0
      %489 = vmatpush1.msra.mxu0 0.0
      %490 = vmatprep.subr.mxu0 0.0
      %491 = vmatpush1.msra.mxu0 0.0
      %492 = vmatprep.mubr.f32.mxu0 0.0
      %493 = vmatmul.mubr.f32.gmra.mrb[0].mxu0 %v427
      %v494 = vpop.f32.mrb[0].mxu0
      %v495 = vadd.f32 1e-06, %v494
      %v496 = vpop.f32.mrb[0].mxu0
      %497 = vdwg.mxu0
      %v498 = vrsqrt.pop %v495
      %v499 = vmul.f32 %v426, %v498
      %v500 = vlaneseq
      %v501 = vshrl.u32 %v500, 7
      %v502 = vsub.s32 2, %v501
      %v503 = vrot.slane %v166, %v502
      %v504 = vmul.f32 %v499, %v503
      %v505 = vlaneseq
      %v506 = vshrl.u32 %v505, 7
      %v507 = vsub.s32 3, %v506
      %v508 = vrot.slane %v166, %v507
      %v509 = vadd.f32 %v504, %v508
      %s510 = scalar_lea.vmem %s2, 256
      %v511 = vld [vmem:[%s510] sm:$0xff]
      %v512 = vld [vmem:[%s510 + $0x8] sm:$0xff]
      %v513 = vld [vmem:[%s510 + $0x10] sm:$0xff]
      %v514 = vld [vmem:[%s510 + $0x18] sm:$0xff]
      %v515 = vld [vmem:[%s510 + $0x20] sm:$0xff]
      %v516 = vld [vmem:[%s510 + $0x28] sm:$0xff]
      %v517 = vld [vmem:[%s510 + $0x30] sm:$0xff]
      %v518 = vld [vmem:[%s510 + $0x38] sm:$0xff]
      %v519 = vld [vmem:[%s510 + $0x40] sm:$0xff]
      %v520 = vld [vmem:[%s510 + $0x48] sm:$0xff]
      %v521 = vld [vmem:[%s510 + $0x50] sm:$0xff]
      %v522 = vld [vmem:[%s510 + $0x58] sm:$0xff]
      %v523 = vld [vmem:[%s510 + $0x60] sm:$0xff]
      %v524 = vld [vmem:[%s510 + $0x68] sm:$0xff]
      %v525 = vld [vmem:[%s510 + $0x70] sm:$0xff]
      %v526 = vld [vmem:[%s510 + $0x78] sm:$0xff]
      %v527 = vlaneseq
      %v528 = vshrl.u32 %v527, 7
      %v529 = vsub.s32 4, %v528
      %v530 = vrot.slane %v166, %v529
      %531 = vmatprep.subr.mxu0 0.0
      %532 = vmatpush1.msra.mxu0 %v511
      %533 = vmatprep.subr.mxu0 0.0
      %534 = vmatpush1.msra.mxu0 %v512
      %535 = vmatprep.subr.mxu0 0.0
      %536 = vmatpush1.msra.mxu0 %v513
      %537 = vmatprep.subr.mxu0 0.0
      %538 = vmatpush1.msra.mxu0 %v514
      %539 = vmatprep.subr.mxu0 0.0
      %540 = vmatpush1.msra.mxu0 %v515
      %541 = vmatprep.subr.mxu0 0.0
      %542 = vmatpush1.msra.mxu0 %v516
      %543 = vmatprep.subr.mxu0 0.0
      %544 = vmatpush1.msra.mxu0 %v517
      %545 = vmatprep.subr.mxu0 0.0
      %546 = vmatpush1.msra.mxu0 %v518
      %547 = vmatprep.subr.mxu0 0.0
      %548 = vmatpush1.msra.mxu0 %v519
      %549 = vmatprep.subr.mxu0 0.0
      %550 = vmatpush1.msra.mxu0 %v520
      %551 = vmatprep.subr.mxu0 0.0
      %552 = vmatpush1.msra.mxu0 %v521
      %553 = vmatprep.subr.mxu0 0.0
      %554 = vmatpush1.msra.mxu0 %v522
      %555 = vmatprep.subr.mxu0 0.0
      %556 = vmatpush1.msra.mxu0 %v523
      %557 = vmatprep.subr.mxu0 0.0
      %558 = vmatpush1.msra.mxu0 %v524
      %559 = vmatprep.subr.mxu0 0.0
      %560 = vmatpush1.msra.mxu0 %v525
      %561 = vmatprep.subr.mxu0 0.0
      %562 = vmatpush1.msra.mxu0 %v526
      %563 = vmatprep.subr.mxu0 0.0
      %564 = vmatpush1.msra.mxu0 0.0
      %565 = vmatprep.subr.mxu0 0.0
      %566 = vmatpush1.msra.mxu0 0.0
      %567 = vmatprep.subr.mxu0 0.0
      %568 = vmatpush1.msra.mxu0 0.0
      %569 = vmatprep.subr.mxu0 0.0
      %570 = vmatpush1.msra.mxu0 0.0
      %571 = vmatprep.subr.mxu0 0.0
      %572 = vmatpush1.msra.mxu0 0.0
      %573 = vmatprep.subr.mxu0 0.0
      %574 = vmatpush1.msra.mxu0 0.0
      %575 = vmatprep.subr.mxu0 0.0
      %576 = vmatpush1.msra.mxu0 0.0
      %577 = vmatprep.subr.mxu0 0.0
      %578 = vmatpush1.msra.mxu0 0.0
      %579 = vmatprep.subr.mxu0 0.0
      %580 = vmatpush1.msra.mxu0 0.0
      %581 = vmatprep.subr.mxu0 0.0
      %582 = vmatpush1.msra.mxu0 0.0
      %583 = vmatprep.subr.mxu0 0.0
      %584 = vmatpush1.msra.mxu0 0.0
      %585 = vmatprep.subr.mxu0 0.0
      %586 = vmatpush1.msra.mxu0 0.0
      %587 = vmatprep.subr.mxu0 0.0
      %588 = vmatpush1.msra.mxu0 0.0
      %589 = vmatprep.subr.mxu0 0.0
      %590 = vmatpush1.msra.mxu0 0.0
      %591 = vmatprep.subr.mxu0 0.0
      %592 = vmatpush1.msra.mxu0 0.0
      %593 = vmatprep.subr.mxu0 0.0
      %594 = vmatpush1.msra.mxu0 0.0
      %595 = vmatprep.mubr.f32.mxu0 0.0
      %596 = vmatmul.mubr.f32.gmra.mrb[0].mxu0 %v509
      %v597 = vpop.f32.mrb[0].mxu0
      %v598 = vadd.f32 %v530, %v597
      %v599 = vpop.f32.mrb[0].mxu0
      %600 = vdwg.mxu0
      %s601 = scalar_lea.vmem %s2, 384
      %v602 = vld [vmem:[%s601] sm:$0xff]
      %v603 = vld [vmem:[%s601 + $0x8] sm:$0xff]
      %v604 = vld [vmem:[%s601 + $0x10] sm:$0xff]
      %v605 = vld [vmem:[%s601 + $0x18] sm:$0xff]
      %v606 = vld [vmem:[%s601 + $0x20] sm:$0xff]
      %v607 = vld [vmem:[%s601 + $0x28] sm:$0xff]
      %v608 = vld [vmem:[%s601 + $0x30] sm:$0xff]
      %v609 = vld [vmem:[%s601 + $0x38] sm:$0xff]
      %v610 = vld [vmem:[%s601 + $0x40] sm:$0xff]
      %v611 = vld [vmem:[%s601 + $0x48] sm:$0xff]
      %v612 = vld [vmem:[%s601 + $0x50] sm:$0xff]
      %v613 = vld [vmem:[%s601 + $0x58] sm:$0xff]
      %v614 = vld [vmem:[%s601 + $0x60] sm:$0xff]
      %v615 = vld [vmem:[%s601 + $0x68] sm:$0xff]
      %v616 = vld [vmem:[%s601 + $0x70] sm:$0xff]
      %v617 = vld [vmem:[%s601 + $0x78] sm:$0xff]
      %v618 = vlaneseq
      %v619 = vshrl.u32 %v618, 7
      %v620 = vsub.s32 5, %v619
      %v621 = vrot.slane %v166, %v620
      %622 = vmatprep.subr.mxu0 0.0
      %623 = vmatpush1.msra.mxu0 %v602
      %624 = vmatprep.subr.mxu0 0.0
      %625 = vmatpush1.msra.mxu0 %v603
      %626 = vmatprep.subr.mxu0 0.0
      %627 = vmatpush1.msra.mxu0 %v604
      %628 = vmatprep.subr.mxu0 0.0
      %629 = vmatpush1.msra.mxu0 %v605
      %630 = vmatprep.subr.mxu0 0.0
      %631 = vmatpush1.msra.mxu0 %v606
      %632 = vmatprep.subr.mxu0 0.0
      %633 = vmatpush1.msra.mxu0 %v607
      %634 = vmatprep.subr.mxu0 0.0
      %635 = vmatpush1.msra.mxu0 %v608
      %636 = vmatprep.subr.mxu0 0.0
      %637 = vmatpush1.msra.mxu0 %v609
      %638 = vmatprep.subr.mxu0 0.0
      %639 = vmatpush1.msra.mxu0 %v610
      %640 = vmatprep.subr.mxu0 0.0
      %641 = vmatpush1.msra.mxu0 %v611
      %642 = vmatprep.subr.mxu0 0.0
      %643 = vmatpush1.msra.mxu0 %v612
      %644 = vmatprep.subr.mxu0 0.0
      %645 = vmatpush1.msra.mxu0 %v613
      %646 = vmatprep.subr.mxu0 0.0
      %647 = vmatpush1.msra.mxu0 %v614
      %648 = vmatprep.subr.mxu0 0.0
      %649 = vmatpush1.msra.mxu0 %v615
      %650 = vmatprep.subr.mxu0 0.0
      %651 = vmatpush1.msra.mxu0 %v616
      %652 = vmatprep.subr.mxu0 0.0
      %653 = vmatpush1.msra.mxu0 %v617
      %654 = vmatprep.subr.mxu0 0.0
      %655 = vmatpush1.msra.mxu0 0.0
      %656 = vmatprep.subr.mxu0 0.0
      %657 = vmatpush1.msra.mxu0 0.0
      %658 = vmatprep.subr.mxu0 0.0
      %659 = vmatpush1.msra.mxu0 0.0
      %660 = vmatprep.subr.mxu0 0.0
      %661 = vmatpush1.msra.mxu0 0.0
      %662 = vmatprep.subr.mxu0 0.0
      %663 = vmatpush1.msra.mxu0 0.0
      %664 = vmatprep.subr.mxu0 0.0
      %665 = vmatpush1.msra.mxu0 0.0
      %666 = vmatprep.subr.mxu0 0.0
      %667 = vmatpush1.msra.mxu0 0.0
      %668 = vmatprep.subr.mxu0 0.0
      %669 = vmatpush1.msra.mxu0 0.0
      %670 = vmatprep.subr.mxu0 0.0
      %671 = vmatpush1.msra.mxu0 0.0
      %672 = vmatprep.subr.mxu0 0.0
      %673 = vmatpush1.msra.mxu0 0.0
      %674 = vmatprep.subr.mxu0 0.0
      %675 = vmatpush1.msra.mxu0 0.0
      %676 = vmatprep.subr.mxu0 0.0
      %677 = vmatpush1.msra.mxu0 0.0
      %678 = vmatprep.subr.mxu0 0.0
      %679 = vmatpush1.msra.mxu0 0.0
      %680 = vmatprep.subr.mxu0 0.0
      %681 = vmatpush1.msra.mxu0 0.0
      %682 = vmatprep.subr.mxu0 0.0
      %683 = vmatpush1.msra.mxu0 0.0
      %684 = vmatprep.subr.mxu0 0.0
      %685 = vmatpush1.msra.mxu0 0.0
      %686 = vmatprep.mubr.f32.mxu0 0.0
      %687 = vmatmul.mubr.f32.gmra.mrb[0].mxu0 %v509
      %v688 = vpop.f32.mrb[0].mxu0
      %v689 = vadd.f32 %v621, %v688
      %v690 = vpop.f32.mrb[0].mxu0
      %691 = vdwg.mxu0
      %s692 = scalar_lea.vmem %s2, 512
      %v693 = vld [vmem:[%s692] sm:$0xff]
      %v694 = vld [vmem:[%s692 + $0x8] sm:$0xff]
      %v695 = vld [vmem:[%s692 + $0x10] sm:$0xff]
      %v696 = vld [vmem:[%s692 + $0x18] sm:$0xff]
      %v697 = vld [vmem:[%s692 + $0x20] sm:$0xff]
      %v698 = vld [vmem:[%s692 + $0x28] sm:$0xff]
      %v699 = vld [vmem:[%s692 + $0x30] sm:$0xff]
      %v700 = vld [vmem:[%s692 + $0x38] sm:$0xff]
      %v701 = vld [vmem:[%s692 + $0x40] sm:$0xff]
      %v702 = vld [vmem:[%s692 + $0x48] sm:$0xff]
      %v703 = vld [vmem:[%s692 + $0x50] sm:$0xff]
      %v704 = vld [vmem:[%s692 + $0x58] sm:$0xff]
      %v705 = vld [vmem:[%s692 + $0x60] sm:$0xff]
      %v706 = vld [vmem:[%s692 + $0x68] sm:$0xff]
      %v707 = vld [vmem:[%s692 + $0x70] sm:$0xff]
      %v708 = vld [vmem:[%s692 + $0x78] sm:$0xff]
      %v709 = vlaneseq
      %v710 = vshrl.u32 %v709, 7
      %v711 = vsub.s32 6, %v710
      %v712 = vrot.slane %v166, %v711
      %713 = vmatprep.subr.mxu0 0.0
      %714 = vmatpush1.msra.mxu0 %v693
      %715 = vmatprep.subr.mxu0 0.0
      %716 = vmatpush1.msra.mxu0 %v694
      %717 = vmatprep.subr.mxu0 0.0
      %718 = vmatpush1.msra.mxu0 %v695
      %719 = vmatprep.subr.mxu0 0.0
      %720 = vmatpush1.msra.mxu0 %v696
      %721 = vmatprep.subr.mxu0 0.0
      %722 = vmatpush1.msra.mxu0 %v697
      %723 = vmatprep.subr.mxu0 0.0
      %724 = vmatpush1.msra.mxu0 %v698
      %725 = vmatprep.subr.mxu0 0.0
      %726 = vmatpush1.msra.mxu0 %v699
      %727 = vmatprep.subr.mxu0 0.0
      %728 = vmatpush1.msra.mxu0 %v700
      %729 = vmatprep.subr.mxu0 0.0
      %730 = vmatpush1.msra.mxu0 %v701
      %731 = vmatprep.subr.mxu0 0.0
      %732 = vmatpush1.msra.mxu0 %v702
      %733 = vmatprep.subr.mxu0 0.0
      %734 = vmatpush1.msra.mxu0 %v703
      %735 = vmatprep.subr.mxu0 0.0
      %736 = vmatpush1.msra.mxu0 %v704
      %737 = vmatprep.subr.mxu0 0.0
      %738 = vmatpush1.msra.mxu0 %v705
      %739 = vmatprep.subr.mxu0 0.0
      %740 = vmatpush1.msra.mxu0 %v706
      %741 = vmatprep.subr.mxu0 0.0
      %742 = vmatpush1.msra.mxu0 %v707
      %743 = vmatprep.subr.mxu0 0.0
      %744 = vmatpush1.msra.mxu0 %v708
      %745 = vmatprep.subr.mxu0 0.0
      %746 = vmatpush1.msra.mxu0 0.0
      %747 = vmatprep.subr.mxu0 0.0
      %748 = vmatpush1.msra.mxu0 0.0
      %749 = vmatprep.subr.mxu0 0.0
      %750 = vmatpush1.msra.mxu0 0.0
      %751 = vmatprep.subr.mxu0 0.0
      %752 = vmatpush1.msra.mxu0 0.0
      %753 = vmatprep.subr.mxu0 0.0
      %754 = vmatpush1.msra.mxu0 0.0
      %755 = vmatprep.subr.mxu0 0.0
      %756 = vmatpush1.msra.mxu0 0.0
      %757 = vmatprep.subr.mxu0 0.0
      %758 = vmatpush1.msra.mxu0 0.0
      %759 = vmatprep.subr.mxu0 0.0
      %760 = vmatpush1.msra.mxu0 0.0
      %761 = vmatprep.subr.mxu0 0.0
      %762 = vmatpush1.msra.mxu0 0.0
      %763 = vmatprep.subr.mxu0 0.0
      %764 = vmatpush1.msra.mxu0 0.0
      %765 = vmatprep.subr.mxu0 0.0
      %766 = vmatpush1.msra.mxu0 0.0
      %767 = vmatprep.subr.mxu0 0.0
      %768 = vmatpush1.msra.mxu0 0.0
      %769 = vmatprep.subr.mxu0 0.0
      %770 = vmatpush1.msra.mxu0 0.0
      %771 = vmatprep.subr.mxu0 0.0
      %772 = vmatpush1.msra.mxu0 0.0
      %773 = vmatprep.subr.mxu0 0.0
      %774 = vmatpush1.msra.mxu0 0.0
      %775 = vmatprep.subr.mxu0 0.0
      %776 = vmatpush1.msra.mxu0 0.0
      %777 = vmatprep.mubr.f32.mxu0 0.0
      %778 = vmatmul.mubr.f32.gmra.mrb[0].mxu0 %v509
      %v779 = vpop.f32.mrb[0].mxu0
      %v780 = vadd.f32 %v712, %v779
      %v781 = vpop.f32.mrb[0].mxu0
      %782 = vdwg.mxu0
      %v783 = vmul.f32 %v689, %v598
      %784 = vmatprep.subr.mxu0 0.0
      %785 = vmatpush1.msra.mxu0 %v185
      %786 = vmatprep.subr.mxu0 0.0
      %787 = vmatpush1.msra.mxu0 %v186
      %788 = vmatprep.subr.mxu0 0.0
      %789 = vmatpush1.msra.mxu0 %v187
      %790 = vmatprep.subr.mxu0 0.0
      %791 = vmatpush1.msra.mxu0 %v188
      %792 = vmatprep.subr.mxu0 0.0
      %793 = vmatpush1.msra.mxu0 %v189
      %794 = vmatprep.subr.mxu0 0.0
      %795 = vmatpush1.msra.mxu0 %v190
      %796 = vmatprep.subr.mxu0 0.0
      %797 = vmatpush1.msra.mxu0 %v191
      %798 = vmatprep.subr.mxu0 0.0
      %799 = vmatpush1.msra.mxu0 %v192
      %800 = vmatprep.subr.mxu0 0.0
      %801 = vmatpush1.msra.mxu0 %v193
      %802 = vmatprep.subr.mxu0 0.0
      %803 = vmatpush1.msra.mxu0 %v194
      %804 = vmatprep.subr.mxu0 0.0
      %805 = vmatpush1.msra.mxu0 %v195
      %806 = vmatprep.subr.mxu0 0.0
      %807 = vmatpush1.msra.mxu0 %v196
      %808 = vmatprep.subr.mxu0 0.0
      %809 = vmatpush1.msra.mxu0 %v197
      %810 = vmatprep.subr.mxu0 0.0
      %811 = vmatpush1.msra.mxu0 %v198
      %812 = vmatprep.subr.mxu0 0.0
      %813 = vmatpush1.msra.mxu0 %v199
      %814 = vmatprep.subr.mxu0 0.0
      %815 = vmatpush1.msra.mxu0 %v200
      %816 = vmatprep.subr.mxu0 0.0
      %817 = vmatpush1.msra.mxu0 0.0
      %818 = vmatprep.subr.mxu0 0.0
      %819 = vmatpush1.msra.mxu0 0.0
      %820 = vmatprep.subr.mxu0 0.0
      %821 = vmatpush1.msra.mxu0 0.0
      %822 = vmatprep.subr.mxu0 0.0
      %823 = vmatpush1.msra.mxu0 0.0
      %824 = vmatprep.subr.mxu0 0.0
      %825 = vmatpush1.msra.mxu0 0.0
      %826 = vmatprep.subr.mxu0 0.0
      %827 = vmatpush1.msra.mxu0 0.0
      %828 = vmatprep.subr.mxu0 0.0
      %829 = vmatpush1.msra.mxu0 0.0
      %830 = vmatprep.subr.mxu0 0.0
      %831 = vmatpush1.msra.mxu0 0.0
      %832 = vmatprep.subr.mxu0 0.0
      %833 = vmatpush1.msra.mxu0 0.0
      %834 = vmatprep.subr.mxu0 0.0
      %835 = vmatpush1.msra.mxu0 0.0
      %836 = vmatprep.subr.mxu0 0.0
      %837 = vmatpush1.msra.mxu0 0.0
      %838 = vmatprep.subr.mxu0 0.0
      %839 = vmatpush1.msra.mxu0 0.0
      %840 = vmatprep.subr.mxu0 0.0
      %841 = vmatpush1.msra.mxu0 0.0
      %842 = vmatprep.subr.mxu0 0.0
      %843 = vmatpush1.msra.mxu0 0.0
      %844 = vmatprep.subr.mxu0 0.0
      %845 = vmatpush1.msra.mxu0 0.0
      %846 = vmatprep.subr.mxu0 0.0
      %847 = vmatpush1.msra.mxu0 0.0
      %848 = vmatprep.mubr.f32.mxu0 0.0
      %849 = vmatmul.mubr.f32.gmra.mrb[0].mxu0 %v783
      %v850 = vpop.f32.mrb[0].mxu0
      %v851 = vadd.f32 0.0, %v850
      %v852 = vpop.f32.mrb[0].mxu0
      %853 = vdwg.mxu0
      %v854 = vmul.f32 %v851, 0.35355338
      %v855 = vsub.f32 %v854, %v854
      %v856 = vmul.f32 %v855, 1.442695
      %v857 = vpow.pop %v856
      %v858 = vadd.f32 %v857, %v857
      %v859 = vadd.f32 %v858, %v857
      %v860 = vadd.f32 %v859, %v857
      %v861 = vrcp.pop %v860
      %v862 = vmul.f32 %v860, %v861
      %v863 = vsub.f32 2.0, %v862
      %v864 = vmul.f32 %v861, %v863
      %v865 = vmul.f32 %v857, %v864
      %v866 = vmul.f32 %v865, %v780
      %v867 = vadd.f32 %v866, %v866
      %v868 = vadd.f32 %v867, %v866
      %v869 = vadd.f32 %v868, %v866
      %s870 = scalar_lea.vmem %s2, 640
      %v871 = vld [vmem:[%s870] sm:$0xff]
      %v872 = vld [vmem:[%s870 + $0x8] sm:$0xff]
      %v873 = vld [vmem:[%s870 + $0x10] sm:$0xff]
      %v874 = vld [vmem:[%s870 + $0x18] sm:$0xff]
      %v875 = vld [vmem:[%s870 + $0x20] sm:$0xff]
      %v876 = vld [vmem:[%s870 + $0x28] sm:$0xff]
      %v877 = vld [vmem:[%s870 + $0x30] sm:$0xff]
      %v878 = vld [vmem:[%s870 + $0x38] sm:$0xff]
      %v879 = vld [vmem:[%s870 + $0x40] sm:$0xff]
      %v880 = vld [vmem:[%s870 + $0x48] sm:$0xff]
      %v881 = vld [vmem:[%s870 + $0x50] sm:$0xff]
      %v882 = vld [vmem:[%s870 + $0x58] sm:$0xff]
      %v883 = vld [vmem:[%s870 + $0x60] sm:$0xff]
      %v884 = vld [vmem:[%s870 + $0x68] sm:$0xff]
      %v885 = vld [vmem:[%s870 + $0x70] sm:$0xff]
      %v886 = vld [vmem:[%s870 + $0x78] sm:$0xff]
      %s887 = scalar_lea.vmem %s2, 768
      %v888 = vld [vmem:[%s887] sm:$0xff]
      %v889 = vld [vmem:[%s887 + $0x8] sm:$0xff]
      %v890 = vld [vmem:[%s887 + $0x10] sm:$0xff]
      %v891 = vld [vmem:[%s887 + $0x18] sm:$0xff]
      %v892 = vld [vmem:[%s887 + $0x20] sm:$0xff]
      %v893 = vld [vmem:[%s887 + $0x28] sm:$0xff]
      %v894 = vld [vmem:[%s887 + $0x30] sm:$0xff]
      %v895 = vld [vmem:[%s887 + $0x38] sm:$0xff]
      %v896 = vld [vmem:[%s887 + $0x40] sm:$0xff]
      %v897 = vld [vmem:[%s887 + $0x48] sm:$0xff]
      %v898 = vld [vmem:[%s887 + $0x50] sm:$0xff]
      %v899 = vld [vmem:[%s887 + $0x58] sm:$0xff]
      %v900 = vld [vmem:[%s887 + $0x60] sm:$0xff]
      %v901 = vld [vmem:[%s887 + $0x68] sm:$0xff]
      %v902 = vld [vmem:[%s887 + $0x70] sm:$0xff]
      %v903 = vld [vmem:[%s887 + $0x78] sm:$0xff]
      %904 = vmatprep.subr.mxu0 0.0
      %905 = vmatpush1.msra.mxu0 %v888
      %906 = vmatprep.subr.mxu0 0.0
      %907 = vmatpush1.msra.mxu0 %v889
      %908 = vmatprep.subr.mxu0 0.0
      %909 = vmatpush1.msra.mxu0 %v890
      %910 = vmatprep.subr.mxu0 0.0
      %911 = vmatpush1.msra.mxu0 %v891
      %912 = vmatprep.subr.mxu0 0.0
      %913 = vmatpush1.msra.mxu0 %v892
      %914 = vmatprep.subr.mxu0 0.0
      %915 = vmatpush1.msra.mxu0 %v893
      %916 = vmatprep.subr.mxu0 0.0
      %917 = vmatpush1.msra.mxu0 %v894
      %918 = vmatprep.subr.mxu0 0.0
      %919 = vmatpush1.msra.mxu0 %v895
      %920 = vmatprep.subr.mxu0 0.0
      %921 = vmatpush1.msra.mxu0 %v896
      %922 = vmatprep.subr.mxu0 0.0
      %923 = vmatpush1.msra.mxu0 %v897
      %924 = vmatprep.subr.mxu0 0.0
      %925 = vmatpush1.msra.mxu0 %v898
      %926 = vmatprep.subr.mxu0 0.0
      %927 = vmatpush1.msra.mxu0 %v899
      %928 = vmatprep.subr.mxu0 0.0
      %929 = vmatpush1.msra.mxu0 %v900
      %930 = vmatprep.subr.mxu0 0.0
      %931 = vmatpush1.msra.mxu0 %v901
      %932 = vmatprep.subr.mxu0 0.0
      %933 = vmatpush1.msra.mxu0 %v902
      %934 = vmatprep.subr.mxu0 0.0
      %935 = vmatpush1.msra.mxu0 %v903
      %936 = vmatprep.subr.mxu0 0.0
      %937 = vmatpush1.msra.mxu0 0.0
      %938 = vmatprep.subr.mxu0 0.0
      %939 = vmatpush1.msra.mxu0 0.0
      %940 = vmatprep.subr.mxu0 0.0
      %941 = vmatpush1.msra.mxu0 0.0
      %942 = vmatprep.subr.mxu0 0.0
      %943 = vmatpush1.msra.mxu0 0.0
      %944 = vmatprep.subr.mxu0 0.0
      %945 = vmatpush1.msra.mxu0 0.0
      %946 = vmatprep.subr.mxu0 0.0
      %947 = vmatpush1.msra.mxu0 0.0
      %948 = vmatprep.subr.mxu0 0.0
      %949 = vmatpush1.msra.mxu0 0.0
      %950 = vmatprep.subr.mxu0 0.0
      %951 = vmatpush1.msra.mxu0 0.0
      %952 = vmatprep.subr.mxu0 0.0
      %953 = vmatpush1.msra.mxu0 0.0
      %954 = vmatprep.subr.mxu0 0.0
      %955 = vmatpush1.msra.mxu0 0.0
      %956 = vmatprep.subr.mxu0 0.0
      %957 = vmatpush1.msra.mxu0 0.0
      %958 = vmatprep.subr.mxu0 0.0
      %959 = vmatpush1.msra.mxu0 0.0
      %960 = vmatprep.subr.mxu0 0.0
      %961 = vmatpush1.msra.mxu0 0.0
      %962 = vmatprep.subr.mxu0 0.0
      %963 = vmatpush1.msra.mxu0 0.0
      %964 = vmatprep.subr.mxu0 0.0
      %965 = vmatpush1.msra.mxu0 0.0
      %966 = vmatprep.subr.mxu0 0.0
      %967 = vmatpush1.msra.mxu0 0.0
      %968 = vmatprep.mubr.f32.mxu0 0.0
      %969 = vmatmul.mubr.f32.gmra.mrb[0].mxu0 %v869
      %v970 = vpop.f32.mrb[0].mxu0
      %v971 = vadd.f32 0.0, %v970
      %v972 = vpop.f32.mrb[0].mxu0
      %973 = vdwg.mxu0
      %974 = vmatprep.subr.mxu0 0.0
      %975 = vmatpush1.msra.mxu0 %v871
      %976 = vmatprep.subr.mxu0 0.0
      %977 = vmatpush1.msra.mxu0 %v872
      %978 = vmatprep.subr.mxu0 0.0
      %979 = vmatpush1.msra.mxu0 %v873
      %980 = vmatprep.subr.mxu0 0.0
      %981 = vmatpush1.msra.mxu0 %v874
      %982 = vmatprep.subr.mxu0 0.0
      %983 = vmatpush1.msra.mxu0 %v875
      %984 = vmatprep.subr.mxu0 0.0
      %985 = vmatpush1.msra.mxu0 %v876
      %986 = vmatprep.subr.mxu0 0.0
      %987 = vmatpush1.msra.mxu0 %v877
      %988 = vmatprep.subr.mxu0 0.0
      %989 = vmatpush1.msra.mxu0 %v878
      %990 = vmatprep.subr.mxu0 0.0
      %991 = vmatpush1.msra.mxu0 %v879
      %992 = vmatprep.subr.mxu0 0.0
      %993 = vmatpush1.msra.mxu0 %v880
      %994 = vmatprep.subr.mxu0 0.0
      %995 = vmatpush1.msra.mxu0 %v881
      %996 = vmatprep.subr.mxu0 0.0
      %997 = vmatpush1.msra.mxu0 %v882
      %998 = vmatprep.subr.mxu0 0.0
      %999 = vmatpush1.msra.mxu0 %v883
      %1000 = vmatprep.subr.mxu0 0.0
      %1001 = vmatpush1.msra.mxu0 %v884
      %1002 = vmatprep.subr.mxu0 0.0
      %1003 = vmatpush1.msra.mxu0 %v885
      %1004 = vmatprep.subr.mxu0 0.0
      %1005 = vmatpush1.msra.mxu0 %v886
      %1006 = vmatprep.subr.mxu0 0.0
      %1007 = vmatpush1.msra.mxu0 0.0
      %1008 = vmatprep.subr.mxu0 0.0
      %1009 = vmatpush1.msra.mxu0 0.0
      %1010 = vmatprep.subr.mxu0 0.0
      %1011 = vmatpush1.msra.mxu0 0.0
      %1012 = vmatprep.subr.mxu0 0.0
      %1013 = vmatpush1.msra.mxu0 0.0
      %1014 = vmatprep.subr.mxu0 0.0
      %1015 = vmatpush1.msra.mxu0 0.0
      %1016 = vmatprep.subr.mxu0 0.0
      %1017 = vmatpush1.msra.mxu0 0.0
      %1018 = vmatprep.subr.mxu0 0.0
      %1019 = vmatpush1.msra.mxu0 0.0
      %1020 = vmatprep.subr.mxu0 0.0
      %1021 = vmatpush1.msra.mxu0 0.0
      %1022 = vmatprep.subr.mxu0 0.0
      %1023 = vmatpush1.msra.mxu0 0.0
      %1024 = vmatprep.subr.mxu0 0.0
      %1025 = vmatpush1.msra.mxu0 0.0
      %1026 = vmatprep.subr.mxu0 0.0
      %1027 = vmatpush1.msra.mxu0 0.0
      %1028 = vmatprep.subr.mxu0 0.0
      %1029 = vmatpush1.msra.mxu0 0.0
      %1030 = vmatprep.subr.mxu0 0.0
      %1031 = vmatpush1.msra.mxu0 0.0
      %1032 = vmatprep.subr.mxu0 0.0
      %1033 = vmatpush1.msra.mxu0 0.0
      %1034 = vmatprep.subr.mxu0 0.0
      %1035 = vmatpush1.msra.mxu0 0.0
      %1036 = vmatprep.subr.mxu0 0.0
      %1037 = vmatpush1.msra.mxu0 0.0
      %1038 = vmatprep.mubr.f32.mxu0 0.0
      %1039 = vmatmul.mubr.f32.gmra.mrb[0].mxu0 %v869
      %v1040 = vpop.f32.mrb[0].mxu0
      %v1041 = vadd.f32 %v971, %v1040
      %v1042 = vpop.f32.mrb[0].mxu0
      %1043 = vdwg.mxu0
      %v1044 = vlaneseq
      %v1045 = vshrl.u32 %v1044, 7
      %v1046 = vsub.s32 7, %v1045
      %v1047 = vrot.slane %v166, %v1046
      %v1048 = vadd.f32 %v1041, %v1047
      %v1049 = vadd.f32 %v1048, %v509
      %1050 = vmatprep.subr.mxu0 0.0
      %1051 = vmatpush1.msra.mxu0 %v168
      %1052 = vmatprep.subr.mxu0 0.0
      %1053 = vmatpush1.msra.mxu0 %v169
      %1054 = vmatprep.subr.mxu0 0.0
      %1055 = vmatpush1.msra.mxu0 %v170
      %1056 = vmatprep.subr.mxu0 0.0
      %1057 = vmatpush1.msra.mxu0 %v171
      %1058 = vmatprep.subr.mxu0 0.0
      %1059 = vmatpush1.msra.mxu0 %v172
      %1060 = vmatprep.subr.mxu0 0.0
      %1061 = vmatpush1.msra.mxu0 %v173
      %1062 = vmatprep.subr.mxu0 0.0
      %1063 = vmatpush1.msra.mxu0 %v174
      %1064 = vmatprep.subr.mxu0 0.0
      %1065 = vmatpush1.msra.mxu0 %v175
      %1066 = vmatprep.subr.mxu0 0.0
      %1067 = vmatpush1.msra.mxu0 %v176
      %1068 = vmatprep.subr.mxu0 0.0
      %1069 = vmatpush1.msra.mxu0 %v177
      %1070 = vmatprep.subr.mxu0 0.0
      %1071 = vmatpush1.msra.mxu0 %v178
      %1072 = vmatprep.subr.mxu0 0.0
      %1073 = vmatpush1.msra.mxu0 %v179
      %1074 = vmatprep.subr.mxu0 0.0
      %1075 = vmatpush1.msra.mxu0 %v180
      %1076 = vmatprep.subr.mxu0 0.0
      %1077 = vmatpush1.msra.mxu0 %v181
      %1078 = vmatprep.subr.mxu0 0.0
      %1079 = vmatpush1.msra.mxu0 %v182
      %1080 = vmatprep.subr.mxu0 0.0
      %1081 = vmatpush1.msra.mxu0 %v183
      %1082 = vmatprep.subr.mxu0 0.0
      %1083 = vmatpush1.msra.mxu0 0.0
      %1084 = vmatprep.subr.mxu0 0.0
      %1085 = vmatpush1.msra.mxu0 0.0
      %1086 = vmatprep.subr.mxu0 0.0
      %1087 = vmatpush1.msra.mxu0 0.0
      %1088 = vmatprep.subr.mxu0 0.0
      %1089 = vmatpush1.msra.mxu0 0.0
      %1090 = vmatprep.subr.mxu0 0.0
      %1091 = vmatpush1.msra.mxu0 0.0
      %1092 = vmatprep.subr.mxu0 0.0
      %1093 = vmatpush1.msra.mxu0 0.0
      %1094 = vmatprep.subr.mxu0 0.0
      %1095 = vmatpush1.msra.mxu0 0.0
      %1096 = vmatprep.subr.mxu0 0.0
      %1097 = vmatpush1.msra.mxu0 0.0
      %1098 = vmatprep.subr.mxu0 0.0
      %1099 = vmatpush1.msra.mxu0 0.0
      %1100 = vmatprep.subr.mxu0 0.0
      %1101 = vmatpush1.msra.mxu0 0.0
      %1102 = vmatprep.subr.mxu0 0.0
      %1103 = vmatpush1.msra.mxu0 0.0
      %1104 = vmatprep.subr.mxu0 0.0
      %1105 = vmatpush1.msra.mxu0 0.0
      %1106 = vmatprep.subr.mxu0 0.0
      %1107 = vmatpush1.msra.mxu0 0.0
      %1108 = vmatprep.subr.mxu0 0.0
      %1109 = vmatpush1.msra.mxu0 0.0
      %1110 = vmatprep.subr.mxu0 0.0
      %1111 = vmatpush1.msra.mxu0 0.0
      %1112 = vmatprep.subr.mxu0 0.0
      %1113 = vmatpush1.msra.mxu0 0.0
      %1114 = vmatprep.mubr.f32.mxu0 0.0
      %1115 = vmatmul.mubr.f32.gmra.mrb[0].mxu0 %v1049
      %v1116 = vpop.f32.mrb[0].mxu0
      %v1117 = vadd.f32 0.0, %v1116
      %v1118 = vpop.f32.mrb[0].mxu0
      %1119 = vdwg.mxu0
      %v1120 = vsub.f32 %v1049, %v1117
      %v1121 = vmul.f32 %v1120, %v1120
      %1122 = vmatprep.subr.mxu0 0.0
      %1123 = vmatpush1.msra.mxu0 %v168
      %1124 = vmatprep.subr.mxu0 0.0
      %1125 = vmatpush1.msra.mxu0 %v169
      %1126 = vmatprep.subr.mxu0 0.0
      %1127 = vmatpush1.msra.mxu0 %v170
      %1128 = vmatprep.subr.mxu0 0.0
      %1129 = vmatpush1.msra.mxu0 %v171
      %1130 = vmatprep.subr.mxu0 0.0
      %1131 = vmatpush1.msra.mxu0 %v172
      %1132 = vmatprep.subr.mxu0 0.0
      %1133 = vmatpush1.msra.mxu0 %v173
      %1134 = vmatprep.subr.mxu0 0.0
      %1135 = vmatpush1.msra.mxu0 %v174
      %1136 = vmatprep.subr.mxu0 0.0
      %1137 = vmatpush1.msra.mxu0 %v175
      %1138 = vmatprep.subr.mxu0 0.0
      %1139 = vmatpush1.msra.mxu0 %v176
      %1140 = vmatprep.subr.mxu0 0.0
      %1141 = vmatpush1.msra.mxu0 %v177
      %1142 = vmatprep.subr.mxu0 0.0
      %1143 = vmatpush1.msra.mxu0 %v178
      %1144 = vmatprep.subr.mxu0 0.0
      %1145 = vmatpush1.msra.mxu0 %v179
      %1146 = vmatprep.subr.mxu0 0.0
      %1147 = vmatpush1.msra.mxu0 %v180
      %1148 = vmatprep.subr.mxu0 0.0
      %1149 = vmatpush1.msra.mxu0 %v181
      %1150 = vmatprep.subr.mxu0 0.0
      %1151 = vmatpush1.msra.mxu0 %v182
      %1152 = vmatprep.subr.mxu0 0.0
      %1153 = vmatpush1.msra.mxu0 %v183
      %1154 = vmatprep.subr.mxu0 0.0
      %1155 = vmatpush1.msra.mxu0 0.0
      %1156 = vmatprep.subr.mxu0 0.0
      %1157 = vmatpush1.msra.mxu0 0.0
      %1158 = vmatprep.subr.mxu0 0.0
      %1159 = vmatpush1.msra.mxu0 0.0
      %1160 = vmatprep.subr.mxu0 0.0
      %1161 = vmatpush1.msra.mxu0 0.0
      %1162 = vmatprep.subr.mxu0 0.0
      %1163 = vmatpush1.msra.mxu0 0.0
      %1164 = vmatprep.subr.mxu0 0.0
      %1165 = vmatpush1.msra.mxu0 0.0
      %1166 = vmatprep.subr.mxu0 0.0
      %1167 = vmatpush1.msra.mxu0 0.0
      %1168 = vmatprep.subr.mxu0 0.0
      %1169 = vmatpush1.msra.mxu0 0.0
      %1170 = vmatprep.subr.mxu0 0.0
      %1171 = vmatpush1.msra.mxu0 0.0
      %1172 = vmatprep.subr.mxu0 0.0
      %1173 = vmatpush1.msra.mxu0 0.0
      %1174 = vmatprep.subr.mxu0 0.0
      %1175 = vmatpush1.msra.mxu0 0.0
      %1176 = vmatprep.subr.mxu0 0.0
      %1177 = vmatpush1.msra.mxu0 0.0
      %1178 = vmatprep.subr.mxu0 0.0
      %1179 = vmatpush1.msra.mxu0 0.0
      %1180 = vmatprep.subr.mxu0 0.0
      %1181 = vmatpush1.msra.mxu0 0.0
      %1182 = vmatprep.subr.mxu0 0.0
      %1183 = vmatpush1.msra.mxu0 0.0
      %1184 = vmatprep.subr.mxu0 0.0
      %1185 = vmatpush1.msra.mxu0 0.0
      %1186 = vmatprep.mubr.f32.mxu0 0.0
      %1187 = vmatmul.mubr.f32.gmra.mrb[0].mxu0 %v1121
      %v1188 = vpop.f32.mrb[0].mxu0
      %v1189 = vadd.f32 1e-06, %v1188
      %v1190 = vpop.f32.mrb[0].mxu0
      %1191 = vdwg.mxu0
      %v1192 = vrsqrt.pop %v1189
      %v1193 = vmul.f32 %v1120, %v1192
      %v1194 = vlaneseq
      %v1195 = vshrl.u32 %v1194, 7
      %v1196 = vsub.s32 0, %v1195
      %v1197 = vrot.slane %v167, %v1196
      %v1198 = vmul.f32 %v1193, %v1197
      %v1199 = vlaneseq
      %v1200 = vshrl.u32 %v1199, 7
      %v1201 = vsub.s32 1, %v1200
      %v1202 = vrot.slane %v167, %v1201
      %v1203 = vadd.f32 %v1198, %v1202
      %s1204 = scalar_lea.vmem %s2, 896
      %v1205 = vld [vmem:[%s1204] sm:$0xff]
      %v1206 = vld [vmem:[%s1204 + $0x8] sm:$0xff]
      %v1207 = vld [vmem:[%s1204 + $0x10] sm:$0xff]
      %v1208 = vld [vmem:[%s1204 + $0x18] sm:$0xff]
      %v1209 = vld [vmem:[%s1204 + $0x20] sm:$0xff]
      %v1210 = vld [vmem:[%s1204 + $0x28] sm:$0xff]
      %v1211 = vld [vmem:[%s1204 + $0x30] sm:$0xff]
      %v1212 = vld [vmem:[%s1204 + $0x38] sm:$0xff]
      %v1213 = vld [vmem:[%s1204 + $0x40] sm:$0xff]
      %v1214 = vld [vmem:[%s1204 + $0x48] sm:$0xff]
      %v1215 = vld [vmem:[%s1204 + $0x50] sm:$0xff]
      %v1216 = vld [vmem:[%s1204 + $0x58] sm:$0xff]
      %v1217 = vld [vmem:[%s1204 + $0x60] sm:$0xff]
      %v1218 = vld [vmem:[%s1204 + $0x68] sm:$0xff]
      %v1219 = vld [vmem:[%s1204 + $0x70] sm:$0xff]
      %v1220 = vld [vmem:[%s1204 + $0x78] sm:$0xff]
      %v1221 = vlaneseq
      %v1222 = vshrl.u32 %v1221, 7
      %v1223 = vsub.s32 2, %v1222
      %v1224 = vrot.slane %v167, %v1223
      %1225 = vmatprep.subr.mxu0 0.0
      %1226 = vmatpush1.msra.mxu0 %v1205
      %1227 = vmatprep.subr.mxu0 0.0
      %1228 = vmatpush1.msra.mxu0 %v1206
      %1229 = vmatprep.subr.mxu0 0.0
      %1230 = vmatpush1.msra.mxu0 %v1207
      %1231 = vmatprep.subr.mxu0 0.0
      %1232 = vmatpush1.msra.mxu0 %v1208
      %1233 = vmatprep.subr.mxu0 0.0
      %1234 = vmatpush1.msra.mxu0 %v1209
      %1235 = vmatprep.subr.mxu0 0.0
      %1236 = vmatpush1.msra.mxu0 %v1210
      %1237 = vmatprep.subr.mxu0 0.0
      %1238 = vmatpush1.msra.mxu0 %v1211
      %1239 = vmatprep.subr.mxu0 0.0
      %1240 = vmatpush1.msra.mxu0 %v1212
      %1241 = vmatprep.subr.mxu0 0.0
      %1242 = vmatpush1.msra.mxu0 %v1213
      %1243 = vmatprep.subr.mxu0 0.0
      %1244 = vmatpush1.msra.mxu0 %v1214
      %1245 = vmatprep.subr.mxu0 0.0
      %1246 = vmatpush1.msra.mxu0 %v1215
      %1247 = vmatprep.subr.mxu0 0.0
      %1248 = vmatpush1.msra.mxu0 %v1216
      %1249 = vmatprep.subr.mxu0 0.0
      %1250 = vmatpush1.msra.mxu0 %v1217
      %1251 = vmatprep.subr.mxu0 0.0
      %1252 = vmatpush1.msra.mxu0 %v1218
      %1253 = vmatprep.subr.mxu0 0.0
      %1254 = vmatpush1.msra.mxu0 %v1219
      %1255 = vmatprep.subr.mxu0 0.0
      %1256 = vmatpush1.msra.mxu0 %v1220
      %1257 = vmatprep.subr.mxu0 0.0
      %1258 = vmatpush1.msra.mxu0 0.0
      %1259 = vmatprep.subr.mxu0 0.0
      %1260 = vmatpush1.msra.mxu0 0.0
      %1261 = vmatprep.subr.mxu0 0.0
      %1262 = vmatpush1.msra.mxu0 0.0
      %1263 = vmatprep.subr.mxu0 0.0
      %1264 = vmatpush1.msra.mxu0 0.0
      %1265 = vmatprep.subr.mxu0 0.0
      %1266 = vmatpush1.msra.mxu0 0.0
      %1267 = vmatprep.subr.mxu0 0.0
      %1268 = vmatpush1.msra.mxu0 0.0
      %1269 = vmatprep.subr.mxu0 0.0
      %1270 = vmatpush1.msra.mxu0 0.0
      %1271 = vmatprep.subr.mxu0 0.0
      %1272 = vmatpush1.msra.mxu0 0.0
      %1273 = vmatprep.subr.mxu0 0.0
      %1274 = vmatpush1.msra.mxu0 0.0
      %1275 = vmatprep.subr.mxu0 0.0
      %1276 = vmatpush1.msra.mxu0 0.0
      %1277 = vmatprep.subr.mxu0 0.0
      %1278 = vmatpush1.msra.mxu0 0.0
      %1279 = vmatprep.subr.mxu0 0.0
      %1280 = vmatpush1.msra.mxu0 0.0
      %1281 = vmatprep.subr.mxu0 0.0
      %1282 = vmatpush1.msra.mxu0 0.0
      %1283 = vmatprep.subr.mxu0 0.0
      %1284 = vmatpush1.msra.mxu0 0.0
      %1285 = vmatprep.subr.mxu0 0.0
      %1286 = vmatpush1.msra.mxu0 0.0
      %1287 = vmatprep.subr.mxu0 0.0
      %1288 = vmatpush1.msra.mxu0 0.0
      %1289 = vmatprep.mubr.f32.mxu0 0.0
      %1290 = vmatmul.mubr.f32.gmra.mrb[0].mxu0 %v1203
      %v1291 = vpop.f32.mrb[0].mxu0
      %v1292 = vadd.f32 %v1224, %v1291
      %v1293 = vpop.f32.mrb[0].mxu0
      %1294 = vdwg.mxu0
      %v1295 = vmul.f32 %v1292, 0.5
      %v1296 = vmul.f32 %v1292, 0.70710677
      %v1297 = vand.u32 2147483647, %v1296
      %v1298 = vmul.f32 %v1297, 0.3275911
      %v1299 = vadd.f32 %v1298, 1.0
      %v1300 = vrcp.pop %v1299
      %v1301 = vmul.f32 1.0, %v1300
      %v1302 = vmul.f32 %v1301, 1.0614054
      %v1303 = vadd.f32 %v1302, -1.4531521
      %v1304 = vmul.f32 %v1301, %v1303
      %v1305 = vadd.f32 %v1304, 1.4214138
      %v1306 = vmul.f32 %v1301, %v1305
      %v1307 = vadd.f32 %v1306, -0.28449672
      %v1308 = vmul.f32 %v1301, %v1307
      %v1309 = vadd.f32 %v1308, 0.2548296
      %v1310 = vmul.f32 %v1301, %v1309
      %v1311 = vmul.f32 %v1296, %v1296
      %v1312 = vsub.f32 0.0, %v1311
      %v1313 = vmul.f32 %v1312, 1.442695
      %v1314 = vpow.pop %v1313
      %v1315 = vmul.f32 %v1310, %v1314
      %v1316 = vsub.f32 1.0, %v1315
      %vm1317 = vcmp.lt.f32.partialorder %v1296, 0.0
      %v1318 = vsub.f32 0.0, %v1316
      %v1319 = vsel %vm1317, %v1318, %v1316
      %v1320 = vadd.f32 %v1319, 1.0
      %v1321 = vmul.f32 %v1295, %v1320
      %s1322 = scalar_lea.vmem %s2, 1024
      %v1323 = vld [vmem:[%s1322] sm:$0xff]
      %v1324 = vld [vmem:[%s1322 + $0x8] sm:$0xff]
      %v1325 = vld [vmem:[%s1322 + $0x10] sm:$0xff]
      %v1326 = vld [vmem:[%s1322 + $0x18] sm:$0xff]
      %v1327 = vld [vmem:[%s1322 + $0x20] sm:$0xff]
      %v1328 = vld [vmem:[%s1322 + $0x28] sm:$0xff]
      %v1329 = vld [vmem:[%s1322 + $0x30] sm:$0xff]
      %v1330 = vld [vmem:[%s1322 + $0x38] sm:$0xff]
      %v1331 = vld [vmem:[%s1322 + $0x40] sm:$0xff]
      %v1332 = vld [vmem:[%s1322 + $0x48] sm:$0xff]
      %v1333 = vld [vmem:[%s1322 + $0x50] sm:$0xff]
      %v1334 = vld [vmem:[%s1322 + $0x58] sm:$0xff]
      %v1335 = vld [vmem:[%s1322 + $0x60] sm:$0xff]
      %v1336 = vld [vmem:[%s1322 + $0x68] sm:$0xff]
      %v1337 = vld [vmem:[%s1322 + $0x70] sm:$0xff]
      %v1338 = vld [vmem:[%s1322 + $0x78] sm:$0xff]
      %v1339 = vlaneseq
      %v1340 = vshrl.u32 %v1339, 7
      %v1341 = vsub.s32 3, %v1340
      %v1342 = vrot.slane %v167, %v1341
      %1343 = vmatprep.subr.mxu0 0.0
      %1344 = vmatpush1.msra.mxu0 %v1323
      %1345 = vmatprep.subr.mxu0 0.0
      %1346 = vmatpush1.msra.mxu0 %v1324
      %1347 = vmatprep.subr.mxu0 0.0
      %1348 = vmatpush1.msra.mxu0 %v1325
      %1349 = vmatprep.subr.mxu0 0.0
      %1350 = vmatpush1.msra.mxu0 %v1326
      %1351 = vmatprep.subr.mxu0 0.0
      %1352 = vmatpush1.msra.mxu0 %v1327
      %1353 = vmatprep.subr.mxu0 0.0
      %1354 = vmatpush1.msra.mxu0 %v1328
      %1355 = vmatprep.subr.mxu0 0.0
      %1356 = vmatpush1.msra.mxu0 %v1329
      %1357 = vmatprep.subr.mxu0 0.0
      %1358 = vmatpush1.msra.mxu0 %v1330
      %1359 = vmatprep.subr.mxu0 0.0
      %1360 = vmatpush1.msra.mxu0 %v1331
      %1361 = vmatprep.subr.mxu0 0.0
      %1362 = vmatpush1.msra.mxu0 %v1332
      %1363 = vmatprep.subr.mxu0 0.0
      %1364 = vmatpush1.msra.mxu0 %v1333
      %1365 = vmatprep.subr.mxu0 0.0
      %1366 = vmatpush1.msra.mxu0 %v1334
      %1367 = vmatprep.subr.mxu0 0.0
      %1368 = vmatpush1.msra.mxu0 %v1335
      %1369 = vmatprep.subr.mxu0 0.0
      %1370 = vmatpush1.msra.mxu0 %v1336
      %1371 = vmatprep.subr.mxu0 0.0
      %1372 = vmatpush1.msra.mxu0 %v1337
      %1373 = vmatprep.subr.mxu0 0.0
      %1374 = vmatpush1.msra.mxu0 %v1338
      %1375 = vmatprep.subr.mxu0 0.0
      %1376 = vmatpush1.msra.mxu0 0.0
      %1377 = vmatprep.subr.mxu0 0.0
      %1378 = vmatpush1.msra.mxu0 0.0
      %1379 = vmatprep.subr.mxu0 0.0
      %1380 = vmatpush1.msra.mxu0 0.0
      %1381 = vmatprep.subr.mxu0 0.0
      %1382 = vmatpush1.msra.mxu0 0.0
      %1383 = vmatprep.subr.mxu0 0.0
      %1384 = vmatpush1.msra.mxu0 0.0
      %1385 = vmatprep.subr.mxu0 0.0
      %1386 = vmatpush1.msra.mxu0 0.0
      %1387 = vmatprep.subr.mxu0 0.0
      %1388 = vmatpush1.msra.mxu0 0.0
      %1389 = vmatprep.subr.mxu0 0.0
      %1390 = vmatpush1.msra.mxu0 0.0
      %1391 = vmatprep.subr.mxu0 0.0
      %1392 = vmatpush1.msra.mxu0 0.0
      %1393 = vmatprep.subr.mxu0 0.0
      %1394 = vmatpush1.msra.mxu0 0.0
      %1395 = vmatprep.subr.mxu0 0.0
      %1396 = vmatpush1.msra.mxu0 0.0
      %1397 = vmatprep.subr.mxu0 0.0
      %1398 = vmatpush1.msra.mxu0 0.0
      %1399 = vmatprep.subr.mxu0 0.0
      %1400 = vmatpush1.msra.mxu0 0.0
      %1401 = vmatprep.subr.mxu0 0.0
      %1402 = vmatpush1.msra.mxu0 0.0
      %1403 = vmatprep.subr.mxu0 0.0
      %1404 = vmatpush1.msra.mxu0 0.0
      %1405 = vmatprep.subr.mxu0 0.0
      %1406 = vmatpush1.msra.mxu0 0.0
      %1407 = vmatprep.mubr.f32.mxu0 0.0
      %1408 = vmatmul.mubr.f32.gmra.mrb[0].mxu0 %v1321
      %v1409 = vpop.f32.mrb[0].mxu0
      %v1410 = vadd.f32 %v1342, %v1409
      %v1411 = vpop.f32.mrb[0].mxu0
      %1412 = vdwg.mxu0
      %1413 = vst [vmem:[%s165] sm:$0xff] %v1410
      %p1414 = scmp.lt.s32.totalorder %s14, 1
      %s1415 = scalar_select %p1414, %s14, 1
      %s1416 = smul.addr %s1415, 8
      %s1417 = scalar_lea.vmem %s3, %s1416
      // Predicated region
      $region33: #{encoder_forward.1} parent=31 // pred_check
        %p1418 = pneg %p100
      $region34: #{encoder_forward.1} parent=31 // pred_check_branch
        %1420 = sbr.rel (%p1418) target = $region36
      $region35: #{encoder_forward.1} parent=31 // pred_region
        _
      $region36: #{encoder_forward.1} parent=31 // pred_fallthru
        _
    $region32: #{encoder_forward.1} parent=5 // pred_fallthru
      _
    %p1421 = scmp.le.s32.totalorder 2, %s9
    // Predicated region
    $region37: #{encoder_forward.1} parent=5 // pred_check
      %p1422 = pneg %p1421
    $region38: #{encoder_forward.1} parent=5 // pred_check_branch
      %1424 = sbr.rel (%p1422) target = $region40
    $region39: #{encoder_forward.1} parent=5 // pred_region
      %s1425 = ssub.s32 %s9, 2
      // Predicated region
      $region41: #{encoder_forward.1} parent=39 // pred_check
        %p1426 = pneg %p106
      $region42: #{encoder_forward.1} parent=39 // pred_check_branch
        %1428 = sbr.rel (%p1426) target = $region44
      $region43: #{encoder_forward.1} parent=39 // pred_region
        %p1429 = scmp.lt.s32.totalorder %s15, 1
        %s1430 = scalar_select %p1429, %s15, 1
        %s1431 = smul.addr %s1430, 8
        %s1432 = scalar_lea.vmem %s3, %s1431
      $region44: #{encoder_forward.1} parent=39 // pred_fallthru
        _
    $region40: #{encoder_forward.1} parent=5 // pred_fallthru
      _
  $region6: #{encoder_forward.1} parent=0 // loop_footer
    %s13 = sadd.s32 1, %s9
  $region7: #{encoder_forward.1} parent=0 // loop_footer_branch
    %8 = sbr.rel target = $region3
  $region8: #{encoder_forward.1} parent=0 // loop_exit
    _

</llo_original>
